<compile_context>
chip_gen: v6e
topology: v6e:2x2x1
jax: 0.10.0
libtpu: 0.0.40
codegen_flags: <defaults>
</compile_context>

<pallas_src>
import functools

import jax
import jax.numpy as jnp
from jax.experimental import pallas as pl
from jax.experimental.pallas import tpu as pltpu


# --------------------------------------------------------------------------- #
# Kernels (channels-last: a 1x1 conv is a per-pixel matmul over channels)
# --------------------------------------------------------------------------- #
def _fused_kernel(x_ref, w1_ref, b1_ref, w2_ref, b2_ref, o_ref):
    """fc1 + ReLU + fc2 in one pass.  w2 is the plain fc2 weight (split == 0)
    or the identity-augmented weight (non-lane-aligned split); pos_bias is
    folded into b2 on the host."""
    h = jnp.dot(x_ref[...].astype(w1_ref.dtype), w1_ref[...],
                preferred_element_type=jnp.float32)
    h = jnp.maximum(h + b1_ref[...], 0.0)
    y = jnp.dot(h.astype(w2_ref.dtype), w2_ref[...],
                preferred_element_type=jnp.float32)
    o_ref[...] = (y + b2_ref[...]).astype(o_ref.dtype)


def _split_kernel(rest, out_rest, x_ref, w1_ref, b1_ref, w2_ref, b2_ref, o_ref):
    """Lane-aligned split path: fc2 runs only on the first `rest` hidden
    channels (rest*out_rest MACs instead of Hid*Cout) and the pass-through
    channels are stored straight through in f32 (exact).  All slices are at
    128-lane boundaries, so loads/stores stay dense."""
    h = jnp.dot(x_ref[...].astype(w1_ref.dtype), w1_ref[...],
                preferred_element_type=jnp.float32)
    h = jnp.maximum(h + b1_ref[...], 0.0)
    y1 = jnp.dot(h[:, :rest].astype(w2_ref.dtype), w2_ref[...],
                 preferred_element_type=jnp.float32)
    o_ref[:, :out_rest] = (y1 + b2_ref[:, :out_rest]).astype(o_ref.dtype)
    o_ref[:, out_rest:] = (h[:, rest:] + b2_ref[:, out_rest:]).astype(o_ref.dtype)


def _stream_kernel(x_ref, w1_ref, b1_ref, w2_ref, b2_ref, o_ref, acc_ref):
    """Hidden-axis streaming path for weights too large to stay VMEM-resident
    (e.g. v7x's 64 MiB): grid = (M tiles, Hid tiles), fc2 output accumulated
    in a (tm, Cout) f32 scratch with pl.when init/finalize."""
    k = pl.program_id(1)

    @pl.when(k == 0)
    def _():
        acc_ref[...] = jnp.zeros_like(acc_ref)

    h = jnp.dot(x_ref[...].astype(w1_ref.dtype), w1_ref[...],
                preferred_element_type=jnp.float32)
    h = jnp.maximum(h + b1_ref[...], 0.0)
    acc_ref[...] += jnp.dot(h.astype(w2_ref.dtype), w2_ref[...],
                            preferred_element_type=jnp.float32)

    @pl.when(k == pl.num_programs(1) - 1)
    def _():
        o_ref[...] = (acc_ref[...] + b2_ref[...]).astype(o_ref.dtype)


# --------------------------------------------------------------------------- #
# Build-feature / hardware probes
# --------------------------------------------------------------------------- #
_BUFFERED1_SUPPORTED = None


def _buffered_single_ok():
    """One-time cached probe: does this jax build lower pl.Buffered(1)
    (single-buffered constant-index operands)?  Replaces the old per-call
    broad try/except that could silently mask genuine lowering/VMEM errors."""
    global _BUFFERED1_SUPPORTED
    if _BUFFERED1_SUPPORTED is None:
        try:
            def _copy(x_ref, o_ref):
                o_ref[...] = x_ref[...]

            out = pl.pallas_call(
                _copy,
                out_shape=jax.ShapeDtypeStruct((8, 128), jnp.float32),
                grid=(1,),
                in_specs=[pl.BlockSpec((8, 128), lambda i: (0, 0),
                                       pipeline_mode=pl.Buffered(1))],
                out_specs=pl.BlockSpec((8, 128), lambda i: (0, 0)),
            )(jnp.zeros((8, 128), jnp.float32))
            jax.block_until_ready(out)
            _BUFFERED1_SUPPORTED = True
        except Exception:
            _BUFFERED1_SUPPORTED = False
    return _BUFFERED1_SUPPORTED


def _vmem_capacity_bytes():
    """Per-generation VMEM capacity (v5e/v6e: 128 MiB, v7x: 64 MiB/TC)."""
    try:
        cap = int(getattr(pltpu.get_tpu_info(), "vmem_capacity_bytes", 0))
        if cap > 0:
            return cap
    except Exception:
        pass
    return 128 * 1024 * 1024


# --------------------------------------------------------------------------- #
# Module
# --------------------------------------------------------------------------- #
class ConvMlpPallas:
    """Deterministically-initialized JAX/Pallas port of timm ConvMlp
    (act=ReLU, norm=Identity, drop=0)."""

    def __init__(self, in_features, hidden_features=None, out_features=None,
                 split=0.0, pos_scale=0.0, compute_dtype=jnp.bfloat16,
                 out_dtype=None, key=jax.random.PRNGKey(42)):
        out_features = out_features or in_features
        hidden_features = hidden_features or in_features
        self.in_features = in_features
        self.hidden_features = hidden_features
        self.out_features = out_features
        self.part_features = int(out_features * split)
        self.rest_features = hidden_features - self.part_features
        self.out_rest = out_features - self.part_features
        self.pos_scale = pos_scale
        self.compute_dtype = compute_dtype
        # Output dtype defaults to the compute dtype (bf16): halves output HBM
        # write traffic and the (tm, Cout) output VMEM footprint.  Pass
        # out_dtype=jnp.float32 to exactly echo the PyTorch output dtype.
        self.out_dtype = out_dtype if out_dtype is not None else compute_dtype

        k1, k2, k3, k4 = jax.random.split(key, 4)
        # fc1: Conv2d(in, hidden, 1) -> weight (hidden, in), bias (hidden,)
        self.w1 = 0.1 * jax.random.normal(k1, (hidden_features, in_features), jnp.float32)
        self.b1 = 0.1 * jax.random.normal(k2, (hidden_features,), jnp.float32)
        # fc2: Conv2d(hidden - part, out - part, 1)
        self.w2 = 0.1 * jax.random.normal(k3, (self.out_rest, self.rest_features), jnp.float32)
        self.b2 = 0.1 * jax.random.normal(k4, (self.out_rest,), jnp.float32)
        self.pos_bias = (jnp.linspace(0.0, pos_scale, hidden_features, dtype=jnp.float32)
                         if pos_scale > 0 else None)

        # ---- kernel-side parameter layout (built once, reused per call) ----
        self._w1_t = self.w1.T.astype(compute_dtype)        # (Cin, Hid)
        self._b1_2d = self.b1.reshape(1, -1)                 # (1, Hid) f32

        # pos_bias folded into the fc2 bias (exact -- everything after the
        # ReLU is linear):  b2_full = [b2 + pos[:rest] @ w2^T , pos[rest:]].
        pos = (self.pos_bias if pos_scale > 0
               else jnp.zeros((hidden_features,), jnp.float32))
        b2_head = self.b2 + pos[: self.rest_features] @ self.w2.T
        self._b2_full = jnp.concatenate(
            [b2_head, pos[self.rest_features:]]).reshape(1, -1)      # (1, Cout) f32

        # fc2 identity-augmented weight  [[w2^T, 0], [0, I]]  (Hid, Cout):
        # exact; used for non-lane-aligned splits and the streaming path.
        w2_aug = jnp.zeros((hidden_features, out_features), jnp.float32)
        w2_aug = w2_aug.at[: self.rest_features, : self.out_rest].set(self.w2.T)
        if self.part_features > 0:
            w2_aug = w2_aug.at[self.rest_features:, self.out_rest:].set(
                jnp.eye(self.part_features, dtype=jnp.float32))
        self._w2_aug = w2_aug.astype(compute_dtype)                   # (Hid, Cout)
        self._w2_real = self.w2.T.astype(compute_dtype)               # (rest, out_rest)

        # Lane-aligned splits skip the identity block entirely (less fc2 MXU
        # work + exact f32 pass-through).  Non-aligned splits (like the tiny
        # test shapes) keep the augmented matmul; their pass-through channels
        # see one extra bf16 rounding (documented, within tolerance).
        self._direct_split = (self.part_features > 0
                              and self.rest_features % 128 == 0
                              and self.out_rest % 128 == 0)

    # ------------------------------------------------------------------ #
    @staticmethod
    def _pick_tiling(m, target_tm):
        """MXU/lane-friendly M tiles: 128-aligned when tiled (8-aligned for
        small m), and an even step count so the 'parallel' M axis splits
        evenly across v7x's two TensorCores."""
        m8 = pl.cdiv(m, 8) * 8
        if m8 <= target_tm:
            return m8, 1
        steps = pl.cdiv(m, target_tm)
        if steps % 2:
            steps += 1
        tm = min(pl.cdiv(pl.cdiv(m, steps), 128) * 128, m8)
        return tm, pl.cdiv(m, tm)

    @staticmethod
    def _vmem_limit(footprint):
        cap = _vmem_capacity_bytes()
        # Leave compiler-scratch headroom; never exceed ~85% of physical
        # (v7x: ~54 MiB of 64; v5e/v6e: ~109 MiB of 128).
        return min(int(cap * 0.85),
                   max(32 * 1024 * 1024, int(footprint * 1.5) + (4 << 20)))

    def _pick_hid_tile(self, cap):
        cb = jnp.dtype(self.compute_dtype).itemsize
        per_chan = (self.in_features + self.out_features) * cb + 4
        for ht in (8192, 4096, 2048, 1024, 512, 256, 128):
            if self.hidden_features % ht == 0 and 2 * ht * per_chan <= cap // 4:
                return ht
        return None

    def _cost(self, m, fc2_k, fc2_n, x_bytes, out_bytes):
        cb = jnp.dtype(self.compute_dtype).itemsize
        return pl.CostEstimate(
            flops=2 * m * (self.in_features * self.hidden_features + fc2_k * fc2_n),
            transcendentals=0,
            bytes_accessed=int(
                m * (self.in_features * x_bytes + self.out_features * out_bytes)
                + (self.in_features * self.hidden_features + fc2_k * fc2_n) * cb
                + (self.hidden_features + self.out_features) * 4),
        )

    # ------------------------------------------------------------------ #
    def _forward_resident(self, x2d, tm, grid_m, out_dtype, single_buffer):
        cin, hid, cout = self.in_features, self.hidden_features, self.out_features
        m = x2d.shape[0]
        xb = jnp.dtype(x2d.dtype).itemsize
        ob = jnp.dtype(out_dtype).itemsize
        cb = jnp.dtype(self.compute_dtype).itemsize

        if single_buffer:
            def const(shape):
                # Constant-index weights/biases: fetched once; single-buffer
                # them to halve their VMEM footprint.
                return pl.BlockSpec(shape, lambda i: (0, 0),
                                    pipeline_mode=pl.Buffered(1))
            wbuf = 1
        else:
            def const(shape):
                return pl.BlockSpec(shape, lambda i: (0, 0))
            wbuf = 2

        if self._direct_split:
            kernel = functools.partial(_split_kernel,
                                       self.rest_features, self.out_rest)
            w2, w2_shape = self._w2_real, (self.rest_features, self.out_rest)
        else:
            kernel = _fused_kernel
            w2, w2_shape = self._w2_aug, (hid, cout)

        footprint = (wbuf * (cin * hid + w2_shape[0] * w2_shape[1]) * cb
                     + wbuf * (hid + cout) * 4
                     + 2 * tm * cin * xb + 2 * tm * cout * ob
                     + tm * hid * 4 + tm * cout * 4)

        return pl.pallas_call(
            kernel,
            out_shape=jax.ShapeDtypeStruct((m, cout), out_dtype),
            grid_spec=pltpu.PrefetchScalarGridSpec(
                num_scalar_prefetch=0,
                grid=(grid_m,),
                in_specs=[pl.BlockSpec((tm, cin), lambda i: (i, 0)),
                          const((cin, hid)),
                          const((1, hid)),
                          const(w2_shape),
                          const((1, cout))],
                out_specs=pl.BlockSpec((tm, cout), lambda i: (i, 0)),
            ),
            compiler_params=pltpu.CompilerParams(
                dimension_semantics=("parallel",),
                vmem_limit_bytes=self._vmem_limit(footprint),
            ),
            cost_estimate=self._cost(m, w2_shape[0], w2_shape[1], xb, ob),
        )(x2d, self._w1_t, self._b1_2d, w2, self._b2_full)

    def _forward_streamed(self, x2d, tm, grid_m, out_dtype, hid_tile):
        cin, hid, cout = self.in_features, self.hidden_features, self.out_features
        m = x2d.shape[0]
        xb = jnp.dtype(x2d.dtype).itemsize
        ob = jnp.dtype(out_dtype).itemsize
        cb = jnp.dtype(self.compute_dtype).itemsize
        grid_h = hid // hid_tile

        footprint = (2 * hid_tile * (cin + cout) * cb + 2 * hid_tile * 4
                     + 2 * tm * cin * xb + 2 * tm * cout * ob
                     + tm * hid_tile * 4 + 2 * tm * cout * 4 + 2 * cout * 4)

        return pl.pallas_call(
            _stream_kernel,
            out_shape=jax.ShapeDtypeStruct((m, cout), out_dtype),
            grid_spec=pltpu.PrefetchScalarGridSpec(
                num_scalar_prefetch=0,
                grid=(grid_m, grid_h),
                in_specs=[pl.BlockSpec((tm, cin), lambda i, k: (i, 0)),
                          pl.BlockSpec((cin, hid_tile), lambda i, k: (0, k)),
                          pl.BlockSpec((1, hid_tile), lambda i, k: (0, k)),
                          pl.BlockSpec((hid_tile, cout), lambda i, k: (k, 0)),
                          pl.BlockSpec((1, cout), lambda i, k: (0, 0))],
                out_specs=pl.BlockSpec((tm, cout), lambda i, k: (i, 0)),
                scratch_shapes=[pltpu.VMEM((tm, cout), jnp.float32)],
            ),
            compiler_params=pltpu.CompilerParams(
                dimension_semantics=("parallel", "arbitrary"),
                vmem_limit_bytes=self._vmem_limit(footprint),
            ),
            cost_estimate=self._cost(m, hid, cout, xb, ob),
        )(x2d, self._w1_t, self._b1_2d, self._w2_aug, self._b2_full)

    # ------------------------------------------------------------------ #
    def apply_2d(self, x2d, target_tm=None, force_hid_tile=None):
        """Channels-last fast path: x2d is (M, Cin), returns (M, Cout).
        x is consumed in its native dtype (bf16 cast happens in-kernel) --
        no wrapper-side cast/pad HBM passes."""
        m, c = x2d.shape
        assert c == self.in_features
        cin, hid, cout = self.in_features, self.hidden_features, self.out_features
        cb = jnp.dtype(self.compute_dtype).itemsize
        cap = _vmem_capacity_bytes()
        weight_bytes = (cin * hid + hid * cout) * cb

        if target_tm is None:
            # Wide hidden layers: shrink the M tile so the (tm, Hid) f32
            # intermediate + weights stay inside v7x's 64 MiB VMEM.
            target_tm = 256 if (512 * hid * 4 + 2 * weight_bytes) > cap // 2 else 512
        tm, grid_m = self._pick_tiling(m, target_tm)

        hid_tile = force_hid_tile
        if hid_tile is None and weight_bytes > cap // 3:
            hid_tile = self._pick_hid_tile(cap)
        if (hid_tile is not None and hid % hid_tile == 0
                and hid_tile % 128 == 0):
            return self._forward_streamed(x2d, tm, grid_m, self.out_dtype, hid_tile)
        return self._forward_resident(x2d, tm, grid_m, self.out_dtype,
                                      single_buffer=_buffered_single_ok())

    def __call__(self, x_nchw, target_tm=None, force_hid_tile=None):
        n, c, h, w = x_nchw.shape
        assert c == self.in_features
        m = n * h * w
        # NCHW -> channels-last (M, Cin).  Callers already holding NHWC /
        # flattened activations should call apply_2d() and skip this HBM
        # round-trip.
        # TODO(synk): add a transposed-layout variant ((Cout, tm) = W @ X with
        # M on the lane axis) so NCHW-resident pipelines avoid both edge
        # transposes entirely.
        x2d = jnp.transpose(x_nchw, (0, 2, 3, 1)).reshape(m, c)
        out2d = self.apply_2d(x2d, target_tm=target_tm, force_hid_tile=force_hid_tile)
        return jnp.transpose(out2d.reshape(n, h, w, self.out_features), (0, 3, 1, 2))

    # Pure-JAX f32 reference (NCHW, same math as the PyTorch module) ---- #
    def reference(self, x_nchw):
        h = jnp.einsum("nchw,oc->nohw", x_nchw, self.w1) + self.b1[None, :, None, None]
        h = jnp.maximum(h, 0.0)
        if self.pos_scale > 0:
            h = h + self.pos_bias[None, :, None, None]
        if self.part_features > 0:
            x1 = h[:, : self.rest_features]
            x2 = h[:, self.rest_features:]
            y1 = jnp.einsum("nchw,oc->nohw", x1, self.w2) + self.b2[None, :, None, None]
            return jnp.concatenate([y1, x2], axis=1)
        return jnp.einsum("nchw,oc->nohw", h, self.w2) + self.b2[None, :, None, None]


# --------------------------------------------------------------------------- #
if __name__ == "__main__":
    key = jax.random.PRNGKey(0)
    kx, kp1, kp2, kp3, kp4, kx3, kx4 = jax.random.split(key, 7)

    # Small correctness shapes.  (Realistic perf needs channel counts >= 128;
    # with Cout=4 the output stores are masked partial stores -- a known perf
    # hazard of the degenerate test shape, not a numerical issue.)
    x = jax.random.normal(kx, (2, 4, 16, 16), jnp.float32)

    def max_err(a, b):
        return float(jnp.max(jnp.abs(a.astype(jnp.float32) - b)))

    # 1) split + pos_bias, non-lane-aligned split -> identity-augmented fc2,
    #    pos_bias folded into the fc2 bias.
    m1 = ConvMlpPallas(in_features=4, hidden_features=32, out_features=4,
                       split=0.5, pos_scale=0.25, key=kp1)
    y1 = jax.block_until_ready(m1(x))
    assert y1.shape == (2, 4, 16, 16)
    e1 = max_err(y1, m1.reference(x))
    assert e1 < 2e-2, f"split path mismatch, max abs err {e1}"

    # 2) plain MLP path (no split, no pos_bias).
    m2 = ConvMlpPallas(in_features=4, hidden_features=32, out_features=4,
                       split=0.0, pos_scale=0.0, key=kp2)
    y2 = jax.block_until_ready(m2(x))
    e2 = max_err(y2, m2.reference(x))
    assert e2 < 2e-2, f"plain path mismatch, max abs err {e2}"

    # 3) hidden-axis streaming path (forced small hid tile so it is exercised
    #    at test size; in production it only triggers when the weights exceed
    #    the per-generation VMEM budget).
    m3 = ConvMlpPallas(in_features=4, hidden_features=256, out_features=4,
                       split=0.0, pos_scale=0.1, key=kp3)
    x3 = jax.random.normal(kx3, (2, 4, 8, 8), jnp.float32)
    y3 = jax.block_until_ready(m3(x3, force_hid_tile=128))
    e3 = max_err(y3, m3.reference(x3))
    assert e3 < 3e-2, f"streaming path mismatch, max abs err {e3}"

    # 4) lane-aligned split (rest=128, out_rest=128) -> direct-store fc2 path
    #    with exact f32 pass-through channels.
    m4 = ConvMlpPallas(in_features=8, hidden_features=256, out_features=256,
                       split=0.5, pos_scale=0.2, key=kp4)
    assert m4._direct_split
    x4 = jax.random.normal(kx4, (2, 8, 8, 8), jnp.float32)
    y4 = jax.block_until_ready(m4(x4))
    e4 = max_err(y4, m4.reference(x4))
    assert e4 < 3e-2, f"direct-split path mismatch, max abs err {e4}"

    print("KERNEL_OK")
</pallas_src>

<mosaic_0001>
module attributes {stable_mosaic.version = 11 : i64} {
  func.func @_copy(%arg0: i32, %arg1: memref<8x128xf32, #tpu.memory_space<vmem>>, %arg2: memref<8x128xf32, #tpu.memory_space<vmem>>) attributes {dimension_semantics = [#tpu.dimension_semantics<arbitrary>], iteration_bounds = array<i64: 1>, scalar_prefetch = 0 : i64, scratch_operands = 0 : i64, tpu.core_type = #tpu.core_type<tc>, window_params = [{pipeline_mode = #tpu.pipeline_mode<synchronous>, transform_indices = @transform_0, window_bounds = array<i64: 8, 128>}, {pipeline_mode = #tpu.pipeline_mode<synchronous>, transform_indices = @transform_1, window_bounds = array<i64: 8, 128>}]} {
    %c0 = arith.constant 0 : index
    %c0_0 = arith.constant 0 : index
    %0 = vector.load %arg1[%c0, %c0_0] : memref<8x128xf32, #tpu.memory_space<vmem>>, vector<8x128xf32>
    %c0_1 = arith.constant 0 : index
    %c0_2 = arith.constant 0 : index
    %1 = vector.load %arg2[%c0_1, %c0_2] : memref<8x128xf32, #tpu.memory_space<vmem>>, vector<8x128xf32>
    tpu.vector_store %arg2[%c0_1, %c0_2], %0 {strides = array<i32>} : memref<8x128xf32, #tpu.memory_space<vmem>>, vector<8x128xf32>,
    return
  }
  func.func @transform_0(%arg0: i32) -> (i32, i32) {
    %c0_i32 = arith.constant 0 : i32
    %c0_i32_0 = arith.constant 0 : i32
    %c0_i32_1 = arith.constant 0 : i32
    return %c0_i32, %c0_i32_0 : i32, i32
  }
  func.func @transform_1(%arg0: i32) -> (i32, i32) {
    %c0_i32 = arith.constant 0 : i32
    %c0_i32_0 = arith.constant 0 : i32
    %c0_i32_1 = arith.constant 0 : i32
    return %c0_i32, %c0_i32_0 : i32, i32
  }
}

module attributes {stable_mosaic.version = 11 : i64} {
  func.func @_fused_kernel(%arg0: i32, %arg1: memref<512x4xf32, #tpu.memory_space<vmem>>, %arg2: memref<4x32xbf16, #tpu.memory_space<vmem>>, %arg3: memref<1x32xf32, #tpu.memory_space<vmem>>, %arg4: memref<32x4xbf16, #tpu.memory_space<vmem>>, %arg5: memref<1x4xf32, #tpu.memory_space<vmem>>, %arg6: memref<512x4xbf16, #tpu.memory_space<vmem>>) attributes {dimension_semantics = [#tpu.dimension_semantics<parallel>], iteration_bounds = array<i64: 1>, scalar_prefetch = 0 : i64, scratch_operands = 0 : i64, tpu.core_type = #tpu.core_type<tc>, window_params = [{transform_indices = @transform_0, window_bounds = array<i64: 512, 4>}, {pipeline_mode = #tpu.pipeline_mode<synchronous>, transform_indices = @transform_1, window_bounds = array<i64: 4, 32>}, {pipeline_mode = #tpu.pipeline_mode<synchronous>, transform_indices = @transform_2, window_bounds = array<i64: 1, 32>}, {pipeline_mode = #tpu.pipeline_mode<synchronous>, transform_indices = @transform_3, window_bounds = array<i64: 32, 4>}, {pipeline_mode = #tpu.pipeline_mode<synchronous>, transform_indices = @transform_4, window_bounds = array<i64: 1, 4>}, {transform_indices = @transform_5, window_bounds = array<i64: 512, 4>}]} {
    %c0 = arith.constant 0 : index
    %c0_0 = arith.constant 0 : index
    %0 = vector.load %arg1[%c0, %c0_0] : memref<512x4xf32, #tpu.memory_space<vmem>>, vector<512x4xf32>
    %1 = arith.truncf %0 : vector<512x4xf32> to vector<512x4xbf16>
    %c0_1 = arith.constant 0 : index
    %c0_2 = arith.constant 0 : index
    %2 = vector.load %arg2[%c0_1, %c0_2] : memref<4x32xbf16, #tpu.memory_space<vmem>>, vector<4x32xbf16>
    %cst = arith.constant dense<0.000000e+00> : vector<512x32xf32>
    %3 = tpu.matmul %1, %2, %cst {dimension_numbers = #tpu.dot_dimension_numbers<[1], [0], [0], [1], [0, 0, 1, 1], [], []>} : vector<512x4xbf16>, vector<4x32xbf16>, vector<512x32xf32> -> vector<512x32xf32>
    %c0_3 = arith.constant 0 : index
    %c0_4 = arith.constant 0 : index
    %4 = vector.load %arg3[%c0_3, %c0_4] : memref<1x32xf32, #tpu.memory_space<vmem>>, vector<1x32xf32>
    %5 = vector.broadcast %4 : vector<1x32xf32> to vector<512x32xf32>
    %6 = arith.addf %3, %5 : vector<512x32xf32>
    %cst_5 = arith.constant 0.000000e+00 : f32
    %7 = vector.broadcast %cst_5 : f32 to vector<512x32xf32>
    %8 = arith.maximumf %6, %7 : vector<512x32xf32>
    %9 = arith.truncf %8 : vector<512x32xf32> to vector<512x32xbf16>
    %c0_6 = arith.constant 0 : index
    %c0_7 = arith.constant 0 : index
    %10 = vector.load %arg4[%c0_6, %c0_7] : memref<32x4xbf16, #tpu.memory_space<vmem>>, vector<32x4xbf16>
    %cst_8 = arith.constant dense<0.000000e+00> : vector<512x4xf32>
    %11 = tpu.matmul %9, %10, %cst_8 {dimension_numbers = #tpu.dot_dimension_numbers<[1], [0], [0], [1], [0, 0, 1, 1], [], []>} : vector<512x32xbf16>, vector<32x4xbf16>, vector<512x4xf32> -> vector<512x4xf32>
    %c0_9 = arith.constant 0 : index
    %c0_10 = arith.constant 0 : index
    %12 = vector.load %arg5[%c0_9, %c0_10] : memref<1x4xf32, #tpu.memory_space<vmem>>, vector<1x4xf32>
    %13 = vector.broadcast %12 : vector<1x4xf32> to vector<512x4xf32>
    %14 = arith.addf %11, %13 : vector<512x4xf32>
    %15 = arith.truncf %14 : vector<512x4xf32> to vector<512x4xbf16>
    %c0_11 = arith.constant 0 : index
    %c0_12 = arith.constant 0 : index
    %16 = vector.load %arg6[%c0_11, %c0_12] : memref<512x4xbf16, #tpu.memory_space<vmem>>, vector<512x4xbf16>
    tpu.vector_store %arg6[%c0_11, %c0_12], %15 {strides = array<i32>} : memref<512x4xbf16, #tpu.memory_space<vmem>>, vector<512x4xbf16>,
    return
  }
  func.func @transform_0(%arg0: i32) -> (i32, i32) {
    %c0_i32 = arith.constant 0 : i32
    %c0_i32_0 = arith.constant 0 : i32
    return %arg0, %c0_i32 : i32, i32
  }
  func.func @transform_1(%arg0: i32) -> (i32, i32) {
    %c0_i32 = arith.constant 0 : i32
    %c0_i32_0 = arith.constant 0 : i32
    %c0_i32_1 = arith.constant 0 : i32
    return %c0_i32, %c0_i32_0 : i32, i32
  }
  func.func @transform_2(%arg0: i32) -> (i32, i32) {
    %c0_i32 = arith.constant 0 : i32
    %c0_i32_0 = arith.constant 0 : i32
    %c0_i32_1 = arith.constant 0 : i32
    return %c0_i32, %c0_i32_0 : i32, i32
  }
  func.func @transform_3(%arg0: i32) -> (i32, i32) {
    %c0_i32 = arith.constant 0 : i32
    %c0_i32_0 = arith.constant 0 : i32
    %c0_i32_1 = arith.constant 0 : i32
    return %c0_i32, %c0_i32_0 : i32, i32
  }
  func.func @transform_4(%arg0: i32) -> (i32, i32) {
    %c0_i32 = arith.constant 0 : i32
    %c0_i32_0 = arith.constant 0 : i32
    %c0_i32_1 = arith.constant 0 : i32
    return %c0_i32, %c0_i32_0 : i32, i32
  }
  func.func @transform_5(%arg0: i32) -> (i32, i32) {
    %c0_i32 = arith.constant 0 : i32
    %c0_i32_0 = arith.constant 0 : i32
    return %arg0, %c0_i32 : i32, i32
  }
}

</mosaic_0001>

<llo_original>
// kernel: tpu_custom_call.1
$region0: #{tpu_custom_call.1}
  #allocation0 [shape = 'u32[]', space=smem, size = 0x4, offset = 0x4, fixed_abs, tag = 'smem constant byte address 0x4 - core index']
  #allocation1 [shape = 'u32[144,128]{1,0:T(1,128)}', space=vmem, size = 0x12000, scoped, tag = 'internal scratch']
  %s0 = inlined_call_operand.hbm [shape: f32[8,128], index: 0, kind: input, shape index: {}]
  %s1 = inlined_call_operand.hbm [shape: f32[8,128], index: 1, kind: output, shape index: {}]
  %s2 = sld [smem:[#allocation0]]
  $region18: #{tpu_custom_call.1} parent=0
    _
  %s4 = ssub.s32 1, %s2
  %s5 = scalar_select 0, %s4, %s2
  $region1: #{tpu_custom_call.1} parent=0
    #allocation2 [shape = 'u8[4096]{0}', space=vmem, size = 0x1000, scoped, tag = 'input window, operand 0, single buffered']
    #allocation3 [shape = 's32[1]{0}', space=sflag, size = 0x4, scoped, tag = 'scoped memory for tpu_custom_call.1']
    #allocation4 [shape = 's32[1]{0}', space=sflag, size = 0x4, scoped, tag = 'scoped memory for tpu_custom_call.1']
    #allocation5 [shape = 'u8[4096]{0}', space=vmem, size = 0x1000, scoped, tag = 'output window, operand 0, single buffered']
    %6 = vsyncpa [#allocation3], 0
    %7 = vsyncpa [#allocation4], 0
    // Predicated region
    $region2: #{tpu_custom_call.1} parent=1 // pred_check
      _
    $region3: #{tpu_custom_call.1} parent=1 // pred_check_branch
      %9 = sbr.rel (0) target = $region5
    $region4: #{tpu_custom_call.1} parent=1 // pred_region
      %s11 = ssub.s32 128, 128
      %12 = vsyncadd [#allocation3], %s11
      %s14 = sshll.u32 [#allocation2], 4
      %s15 = int_to_ptr.vmem [resolvable:$true] %s14
      %17 = dma.hbm_to_vmem [thread:$0]  %s0, 128, %s15, [#allocation3]
    $region5: #{tpu_custom_call.1} parent=1 // pred_fallthru
      _
    // Predicated region
    $region6: #{tpu_custom_call.1} parent=1 // pred_check
      _
    $region7: #{tpu_custom_call.1} parent=1 // pred_check_branch
      %19 = sbr.rel (0) target = $region9
    $region8: #{tpu_custom_call.1} parent=1 // pred_region
      %20 = dma.done [#allocation3], 128
    $region9: #{tpu_custom_call.1} parent=1 // pred_fallthru
      _
    %v21 = vld [vmem:[#allocation2] sm:$0xff]
    %22 = vst [vmem:[#allocation5] sm:$0xff] %v21
    // Predicated region
    $region10: #{tpu_custom_call.1} parent=1 // pred_check
      _
    $region11: #{tpu_custom_call.1} parent=1 // pred_check_branch
      %24 = sbr.rel (0) target = $region13
    $region12: #{tpu_custom_call.1} parent=1 // pred_region
      %s26 = ssub.s32 128, 128
      %27 = vsyncadd [#allocation4], %s26
      %s29 = sshll.u32 [#allocation5], 4
      %s30 = int_to_ptr.vmem [resolvable:$true] %s29
      %32 = dma.vmem_to_hbm [thread:$0]  %s30, 128, %s1, [#allocation4]
    $region13: #{tpu_custom_call.1} parent=1 // pred_fallthru
      _
    // Predicated region
    $region14: #{tpu_custom_call.1} parent=1 // pred_check
      _
    $region15: #{tpu_custom_call.1} parent=1 // pred_check_branch
      %34 = sbr.rel (0) target = $region17
    $region16: #{tpu_custom_call.1} parent=1 // pred_region
      %35 = dma.done [#allocation4], 128
    $region17: #{tpu_custom_call.1} parent=1 // pred_fallthru
      _
    %36 = vsyncpa [#allocation3], 1
    %37 = vsyncpa [#allocation4], 1

// kernel: tpu_custom_call.1
$region0: #{tpu_custom_call.1}
  #allocation0 [shape = 'u32[]', space=smem, size = 0x4, offset = 0x4, fixed_abs, tag = 'smem constant byte address 0x4 - core index']
  #allocation1 [shape = 'u32[144,128]{1,0:T(1,128)}', space=vmem, size = 0x12000, scoped, tag = 'internal scratch']
  %s0 = inlined_call_operand.vmem [shape: f32[512,4], index: 0, kind: input, shape index: {}]
  %s1 = inlined_call_operand.vmem [shape: bf16[4,32], index: 1, kind: input, shape index: {}]
  %s2 = inlined_call_operand.vmem [shape: f32[1,32], index: 2, kind: input, shape index: {}]
  %s3 = inlined_call_operand.vmem [shape: bf16[32,4], index: 3, kind: input, shape index: {}]
  %s4 = inlined_call_operand.vmem [shape: f32[1,4], index: 4, kind: input, shape index: {}]
  %s5 = inlined_call_operand.vmem [shape: bf16[512,4], index: 5, kind: output, shape index: {}]
  %s6 = sld [smem:[#allocation0]]
  $region30: #{tpu_custom_call.1} parent=0
    _
  %s8 = ssub.s32 1, %s6
  %s9 = scalar_select 0, %s8, %s6
  // Predicated region
  $region2: #{tpu_custom_call.1} parent=0 // pred_check
    _
  $region3: #{tpu_custom_call.1} parent=0 // pred_check_branch
    %11 = sbr.rel (0) target = $region5
  $region4: #{tpu_custom_call.1} parent=0 // pred_region
    _
  $region5: #{tpu_custom_call.1} parent=0 // pred_fallthru
    _
  // Predicated region
  $region6: #{tpu_custom_call.1} parent=0 // pred_check
    _
  $region7: #{tpu_custom_call.1} parent=0 // pred_check_branch
    %13 = sbr.rel (0) target = $region9
  $region8: #{tpu_custom_call.1} parent=0 // pred_region
    _
  $region9: #{tpu_custom_call.1} parent=0 // pred_fallthru
    _
  // Predicated region
  $region10: #{tpu_custom_call.1} parent=0 // pred_check
    _
  $region11: #{tpu_custom_call.1} parent=0 // pred_check_branch
    %15 = sbr.rel (0) target = $region13
  $region12: #{tpu_custom_call.1} parent=0 // pred_region
    _
  $region13: #{tpu_custom_call.1} parent=0 // pred_fallthru
    _
  // Predicated region
  $region14: #{tpu_custom_call.1} parent=0 // pred_check
    _
  $region15: #{tpu_custom_call.1} parent=0 // pred_check_branch
    %17 = sbr.rel (0) target = $region17
  $region16: #{tpu_custom_call.1} parent=0 // pred_region
    _
  $region17: #{tpu_custom_call.1} parent=0 // pred_fallthru
    _
  // Predicated region
  $region18: #{tpu_custom_call.1} parent=0 // pred_check
    _
  $region19: #{tpu_custom_call.1} parent=0 // pred_check_branch
    %19 = sbr.rel (0) target = $region21
  $region20: #{tpu_custom_call.1} parent=0 // pred_region
    _
  $region21: #{tpu_custom_call.1} parent=0 // pred_fallthru
    _
  %v21 = vld [vmem:[%s0] sm:$0xff]
  %v22 = vld [vmem:[%s0 + $0x8] sm:$0xff]
  %v23 = vld [vmem:[%s0 + $0x10] sm:$0xff]
  %v24 = vld [vmem:[%s0 + $0x18] sm:$0xff]
  %v25 = vld [vmem:[%s0 + $0x20] sm:$0xff]
  %v26 = vld [vmem:[%s0 + $0x28] sm:$0xff]
  %v27 = vld [vmem:[%s0 + $0x30] sm:$0xff]
  %v28 = vld [vmem:[%s0 + $0x38] sm:$0xff]
  %v29 = vld [vmem:[%s0 + $0x40] sm:$0xff]
  %v30 = vld [vmem:[%s0 + $0x48] sm:$0xff]
  %v31 = vld [vmem:[%s0 + $0x50] sm:$0xff]
  %v32 = vld [vmem:[%s0 + $0x58] sm:$0xff]
  %v33 = vld [vmem:[%s0 + $0x60] sm:$0xff]
  %v34 = vld [vmem:[%s0 + $0x68] sm:$0xff]
  %v35 = vld [vmem:[%s0 + $0x70] sm:$0xff]
  %v36 = vld [vmem:[%s0 + $0x78] sm:$0xff]
  %v37 = vld [vmem:[%s0 + $0x80] sm:$0xff]
  %v38 = vld [vmem:[%s0 + $0x88] sm:$0xff]
  %v39 = vld [vmem:[%s0 + $0x90] sm:$0xff]
  %v40 = vld [vmem:[%s0 + $0x98] sm:$0xff]
  %v41 = vld [vmem:[%s0 + $0xa0] sm:$0xff]
  %v42 = vld [vmem:[%s0 + $0xa8] sm:$0xff]
  %v43 = vld [vmem:[%s0 + $0xb0] sm:$0xff]
  %v44 = vld [vmem:[%s0 + $0xb8] sm:$0xff]
  %v45 = vld [vmem:[%s0 + $0xc0] sm:$0xff]
  %v46 = vld [vmem:[%s0 + $0xc8] sm:$0xff]
  %v47 = vld [vmem:[%s0 + $0xd0] sm:$0xff]
  %v48 = vld [vmem:[%s0 + $0xd8] sm:$0xff]
  %v49 = vld [vmem:[%s0 + $0xe0] sm:$0xff]
  %v50 = vld [vmem:[%s0 + $0xe8] sm:$0xff]
  %v51 = vld [vmem:[%s0 + $0xf0] sm:$0xff]
  %v52 = vld [vmem:[%s0 + $0xf8] sm:$0xff]
  %v53 = vld [vmem:[%s0 + $0x100] sm:$0xff]
  %v54 = vld [vmem:[%s0 + $0x108] sm:$0xff]
  %v55 = vld [vmem:[%s0 + $0x110] sm:$0xff]
  %v56 = vld [vmem:[%s0 + $0x118] sm:$0xff]
  %v57 = vld [vmem:[%s0 + $0x120] sm:$0xff]
  %v58 = vld [vmem:[%s0 + $0x128] sm:$0xff]
  %v59 = vld [vmem:[%s0 + $0x130] sm:$0xff]
  %v60 = vld [vmem:[%s0 + $0x138] sm:$0xff]
  %v61 = vld [vmem:[%s0 + $0x140] sm:$0xff]
  %v62 = vld [vmem:[%s0 + $0x148] sm:$0xff]
  %v63 = vld [vmem:[%s0 + $0x150] sm:$0xff]
  %v64 = vld [vmem:[%s0 + $0x158] sm:$0xff]
  %v65 = vld [vmem:[%s0 + $0x160] sm:$0xff]
  %v66 = vld [vmem:[%s0 + $0x168] sm:$0xff]
  %v67 = vld [vmem:[%s0 + $0x170] sm:$0xff]
  %v68 = vld [vmem:[%s0 + $0x178] sm:$0xff]
  %v69 = vld [vmem:[%s0 + $0x180] sm:$0xff]
  %v70 = vld [vmem:[%s0 + $0x188] sm:$0xff]
  %v71 = vld [vmem:[%s0 + $0x190] sm:$0xff]
  %v72 = vld [vmem:[%s0 + $0x198] sm:$0xff]
  %v73 = vld [vmem:[%s0 + $0x1a0] sm:$0xff]
  %v74 = vld [vmem:[%s0 + $0x1a8] sm:$0xff]
  %v75 = vld [vmem:[%s0 + $0x1b0] sm:$0xff]
  %v76 = vld [vmem:[%s0 + $0x1b8] sm:$0xff]
  %v77 = vld [vmem:[%s0 + $0x1c0] sm:$0xff]
  %v78 = vld [vmem:[%s0 + $0x1c8] sm:$0xff]
  %v79 = vld [vmem:[%s0 + $0x1d0] sm:$0xff]
  %v80 = vld [vmem:[%s0 + $0x1d8] sm:$0xff]
  %v81 = vld [vmem:[%s0 + $0x1e0] sm:$0xff]
  %v82 = vld [vmem:[%s0 + $0x1e8] sm:$0xff]
  %v83 = vld [vmem:[%s0 + $0x1f0] sm:$0xff]
  %v84 = vld [vmem:[%s0 + $0x1f8] sm:$0xff]
  %v85 = vpack.c.bf16 %v22, %v21
  %v86 = vpack.c.bf16 %v24, %v23
  %v87 = vpack.c.bf16 %v26, %v25
  %v88 = vpack.c.bf16 %v28, %v27
  %v89 = vpack.c.bf16 %v30, %v29
  %v90 = vpack.c.bf16 %v32, %v31
  %v91 = vpack.c.bf16 %v34, %v33
  %v92 = vpack.c.bf16 %v36, %v35
  %v93 = vpack.c.bf16 %v38, %v37
  %v94 = vpack.c.bf16 %v40, %v39
  %v95 = vpack.c.bf16 %v42, %v41
  %v96 = vpack.c.bf16 %v44, %v43
  %v97 = vpack.c.bf16 %v46, %v45
  %v98 = vpack.c.bf16 %v48, %v47
  %v99 = vpack.c.bf16 %v50, %v49
  %v100 = vpack.c.bf16 %v52, %v51
  %v101 = vpack.c.bf16 %v54, %v53
  %v102 = vpack.c.bf16 %v56, %v55
  %v103 = vpack.c.bf16 %v58, %v57
  %v104 = vpack.c.bf16 %v60, %v59
  %v105 = vpack.c.bf16 %v62, %v61
  %v106 = vpack.c.bf16 %v64, %v63
  %v107 = vpack.c.bf16 %v66, %v65
  %v108 = vpack.c.bf16 %v68, %v67
  %v109 = vpack.c.bf16 %v70, %v69
  %v110 = vpack.c.bf16 %v72, %v71
  %v111 = vpack.c.bf16 %v74, %v73
  %v112 = vpack.c.bf16 %v76, %v75
  %v113 = vpack.c.bf16 %v78, %v77
  %v114 = vpack.c.bf16 %v80, %v79
  %v115 = vpack.c.bf16 %v82, %v81
  %v116 = vpack.c.bf16 %v84, %v83
  %v117 = vld [vmem:[%s1] sm:$0x3]
  %v118 = vld [vmem:[%s2] sm:$0x1]
  %v120 = vlaneseq
  %v121 = vshrl.u32 %v120, 7
  %v122 = vsub.s32 0, %v121
  %v123 = vrot.slane %v118, %v122
  %vm125 = vcmask 31744
  %v127 = vsel %vm125, %v85, 0
  %v130 = vsel %vm125, %v86, 0
  %v133 = vsel %vm125, %v87, 0
  %v136 = vsel %vm125, %v88, 0
  %v139 = vsel %vm125, %v89, 0
  %v142 = vsel %vm125, %v90, 0
  %v145 = vsel %vm125, %v91, 0
  %v148 = vsel %vm125, %v92, 0
  %v151 = vsel %vm125, %v93, 0
  %v154 = vsel %vm125, %v94, 0
  %v157 = vsel %vm125, %v95, 0
  %v160 = vsel %vm125, %v96, 0
  %v163 = vsel %vm125, %v97, 0
  %v166 = vsel %vm125, %v98, 0
  %v169 = vsel %vm125, %v99, 0
  %v172 = vsel %vm125, %v100, 0
  %v175 = vsel %vm125, %v101, 0
  %v178 = vsel %vm125, %v102, 0
  %v181 = vsel %vm125, %v103, 0
  %v184 = vsel %vm125, %v104, 0
  %v187 = vsel %vm125, %v105, 0
  %v190 = vsel %vm125, %v106, 0
  %v193 = vsel %vm125, %v107, 0
  %v196 = vsel %vm125, %v108, 0
  %v199 = vsel %vm125, %v109, 0
  %v202 = vsel %vm125, %v110, 0
  %v205 = vsel %vm125, %v111, 0
  %v208 = vsel %vm125, %v112, 0
  %v211 = vsel %vm125, %v113, 0
  %v214 = vsel %vm125, %v114, 0
  %v217 = vsel %vm125, %v115, 0
  %v220 = vsel %vm125, %v116, 0
  %vm222 = vcmask 1041408
  %v224 = vsel %vm222, %v117, 0
  %226 = vmatprep.subr.bf16.mxu0 0
  %227 = vmatpush1.bf16.msra.mxu0 0
  %228 = vmatprep.subr.bf16.mxu0 0
  %229 = vmatpush1.bf16.msra.mxu0 0
  %230 = vmatprep.subr.bf16.mxu0 0
  %231 = vmatpush1.bf16.msra.mxu0 0
  %232 = vmatprep.subr.bf16.mxu0 0
  %233 = vmatpush1.bf16.msra.mxu0 0
  %234 = vmatprep.subr.bf16.mxu0 0
  %235 = vmatpush1.bf16.msra.mxu0 0
  %236 = vmatprep.subr.bf16.mxu0 0
  %237 = vmatpush1.bf16.msra.mxu0 0
  %238 = vmatprep.subr.bf16.mxu0 0
  %239 = vmatpush1.bf16.msra.mxu0 0
  %240 = vmatprep.subr.bf16.mxu0 0
  %241 = vmatpush1.bf16.msra.mxu0 %v224
  %242 = vmatprep.subr.bf16.mxu0 0
  %243 = vmatpush2.bf16.msra.mxu0 0
  %244 = vmatprep.subr.bf16.mxu0 0
  %245 = vmatpush2.bf16.msra.mxu0 0
  %246 = vmatprep.subr.bf16.mxu0 0
  %247 = vmatpush2.bf16.msra.mxu0 0
  %248 = vmatprep.subr.bf16.mxu0 0
  %249 = vmatpush2.bf16.msra.mxu0 0
  %250 = vmatprep.subr.bf16.mxu0 0
  %251 = vmatpush2.bf16.msra.mxu0 0
  %252 = vmatprep.subr.bf16.mxu0 0
  %253 = vmatpush2.bf16.msra.mxu0 0
  %254 = vmatprep.subr.bf16.mxu0 0
  %255 = vmatpush2.bf16.msra.mxu0 0
  %256 = vmatprep.subr.bf16.mxu0 0
  %257 = vmatpush2.bf16.msra.mxu0 0
  %258 = vmatprep.mubr.bf16.mxu0 0
  %259 = vmatmul.mubr.bf16.gmra.mxu0 %v127
  %v260 = vpop.f32.mrf.mxu0
  %v261 = vadd.f32 %v123, %v260
  %v262 = vpop.f32.mrf.mxu0
  %v263 = vpop.f32.mrf.mxu0
  %v264 = vadd.f32 %v123, %v263
  %v265 = vpop.f32.mrf.mxu0
  %266 = vmatprep.mubr.bf16.mxu0 0
  %267 = vmatmul.mubr.bf16.gmra.mxu0 %v130
  %v268 = vpop.f32.mrf.mxu0
  %v269 = vadd.f32 %v123, %v268
  %v270 = vpop.f32.mrf.mxu0
  %v271 = vpop.f32.mrf.mxu0
  %v272 = vadd.f32 %v123, %v271
  %v273 = vpop.f32.mrf.mxu0
  %274 = vmatprep.mubr.bf16.mxu0 0
  %275 = vmatmul.mubr.bf16.gmra.mxu0 %v133
  %v276 = vpop.f32.mrf.mxu0
  %v277 = vadd.f32 %v123, %v276
  %v278 = vpop.f32.mrf.mxu0
  %v279 = vpop.f32.mrf.mxu0
  %v280 = vadd.f32 %v123, %v279
  %v281 = vpop.f32.mrf.mxu0
  %282 = vmatprep.mubr.bf16.mxu0 0
  %283 = vmatmul.mubr.bf16.gmra.mxu0 %v136
  %v284 = vpop.f32.mrf.mxu0
  %v285 = vadd.f32 %v123, %v284
  %v286 = vpop.f32.mrf.mxu0
  %v287 = vpop.f32.mrf.mxu0
  %v288 = vadd.f32 %v123, %v287
  %v289 = vpop.f32.mrf.mxu0
  %290 = vmatprep.mubr.bf16.mxu0 0
  %291 = vmatmul.mubr.bf16.gmra.mxu0 %v139
  %v292 = vpop.f32.mrf.mxu0
  %v293 = vadd.f32 %v123, %v292
  %v294 = vpop.f32.mrf.mxu0
  %v295 = vpop.f32.mrf.mxu0
  %v296 = vadd.f32 %v123, %v295
  %v297 = vpop.f32.mrf.mxu0
  %298 = vmatprep.mubr.bf16.mxu0 0
  %299 = vmatmul.mubr.bf16.gmra.mxu0 %v142
  %v300 = vpop.f32.mrf.mxu0
  %v301 = vadd.f32 %v123, %v300
  %v302 = vpop.f32.mrf.mxu0
  %v303 = vpop.f32.mrf.mxu0
  %v304 = vadd.f32 %v123, %v303
  %v305 = vpop.f32.mrf.mxu0
  %306 = vmatprep.mubr.bf16.mxu0 0
  %307 = vmatmul.mubr.bf16.gmra.mxu0 %v145
  %v308 = vpop.f32.mrf.mxu0
  %v309 = vadd.f32 %v123, %v308
  %v310 = vpop.f32.mrf.mxu0
  %v311 = vpop.f32.mrf.mxu0
  %v312 = vadd.f32 %v123, %v311
  %v313 = vpop.f32.mrf.mxu0
  %314 = vmatprep.mubr.bf16.mxu0 0
  %315 = vmatmul.mubr.bf16.gmra.mxu0 %v148
  %v316 = vpop.f32.mrf.mxu0
  %v317 = vadd.f32 %v123, %v316
  %v318 = vpop.f32.mrf.mxu0
  %v319 = vpop.f32.mrf.mxu0
  %v320 = vadd.f32 %v123, %v319
  %v321 = vpop.f32.mrf.mxu0
  %322 = vmatprep.mubr.bf16.mxu0 0
  %323 = vmatmul.mubr.bf16.gmra.mxu0 %v151
  %v324 = vpop.f32.mrf.mxu0
  %v325 = vadd.f32 %v123, %v324
  %v326 = vpop.f32.mrf.mxu0
  %v327 = vpop.f32.mrf.mxu0
  %v328 = vadd.f32 %v123, %v327
  %v329 = vpop.f32.mrf.mxu0
  %330 = vmatprep.mubr.bf16.mxu0 0
  %331 = vmatmul.mubr.bf16.gmra.mxu0 %v154
  %v332 = vpop.f32.mrf.mxu0
  %v333 = vadd.f32 %v123, %v332
  %v334 = vpop.f32.mrf.mxu0
  %v335 = vpop.f32.mrf.mxu0
  %v336 = vadd.f32 %v123, %v335
  %v337 = vpop.f32.mrf.mxu0
  %338 = vmatprep.mubr.bf16.mxu0 0
  %339 = vmatmul.mubr.bf16.gmra.mxu0 %v157
  %v340 = vpop.f32.mrf.mxu0
  %v341 = vadd.f32 %v123, %v340
  %v342 = vpop.f32.mrf.mxu0
  %v343 = vpop.f32.mrf.mxu0
  %v344 = vadd.f32 %v123, %v343
  %v345 = vpop.f32.mrf.mxu0
  %346 = vmatprep.mubr.bf16.mxu0 0
  %347 = vmatmul.mubr.bf16.gmra.mxu0 %v160
  %v348 = vpop.f32.mrf.mxu0
  %v349 = vadd.f32 %v123, %v348
  %v350 = vpop.f32.mrf.mxu0
  %v351 = vpop.f32.mrf.mxu0
  %v352 = vadd.f32 %v123, %v351
  %v353 = vpop.f32.mrf.mxu0
  %354 = vmatprep.mubr.bf16.mxu0 0
  %355 = vmatmul.mubr.bf16.gmra.mxu0 %v163
  %v356 = vpop.f32.mrf.mxu0
  %v357 = vadd.f32 %v123, %v356
  %v358 = vpop.f32.mrf.mxu0
  %v359 = vpop.f32.mrf.mxu0
  %v360 = vadd.f32 %v123, %v359
  %v361 = vpop.f32.mrf.mxu0
  %362 = vmatprep.mubr.bf16.mxu0 0
  %363 = vmatmul.mubr.bf16.gmra.mxu0 %v166
  %v364 = vpop.f32.mrf.mxu0
  %v365 = vadd.f32 %v123, %v364
  %v366 = vpop.f32.mrf.mxu0
  %v367 = vpop.f32.mrf.mxu0
  %v368 = vadd.f32 %v123, %v367
  %v369 = vpop.f32.mrf.mxu0
  %370 = vmatprep.mubr.bf16.mxu0 0
  %371 = vmatmul.mubr.bf16.gmra.mxu0 %v169
  %v372 = vpop.f32.mrf.mxu0
  %v373 = vadd.f32 %v123, %v372
  %v374 = vpop.f32.mrf.mxu0
  %v375 = vpop.f32.mrf.mxu0
  %v376 = vadd.f32 %v123, %v375
  %v377 = vpop.f32.mrf.mxu0
  %378 = vmatprep.mubr.bf16.mxu0 0
  %379 = vmatmul.mubr.bf16.gmra.mxu0 %v172
  %v380 = vpop.f32.mrf.mxu0
  %v381 = vadd.f32 %v123, %v380
  %v382 = vpop.f32.mrf.mxu0
  %v383 = vpop.f32.mrf.mxu0
  %v384 = vadd.f32 %v123, %v383
  %v385 = vpop.f32.mrf.mxu0
  %386 = vmatprep.mubr.bf16.mxu0 0
  %387 = vmatmul.mubr.bf16.gmra.mxu0 %v175
  %v388 = vpop.f32.mrf.mxu0
  %v389 = vadd.f32 %v123, %v388
  %v390 = vpop.f32.mrf.mxu0
  %v391 = vpop.f32.mrf.mxu0
  %v392 = vadd.f32 %v123, %v391
  %v393 = vpop.f32.mrf.mxu0
  %394 = vmatprep.mubr.bf16.mxu0 0
  %395 = vmatmul.mubr.bf16.gmra.mxu0 %v178
  %v396 = vpop.f32.mrf.mxu0
  %v397 = vadd.f32 %v123, %v396
  %v398 = vpop.f32.mrf.mxu0
  %v399 = vpop.f32.mrf.mxu0
  %v400 = vadd.f32 %v123, %v399
  %v401 = vpop.f32.mrf.mxu0
  %402 = vmatprep.mubr.bf16.mxu0 0
  %403 = vmatmul.mubr.bf16.gmra.mxu0 %v181
  %v404 = vpop.f32.mrf.mxu0
  %v405 = vadd.f32 %v123, %v404
  %v406 = vpop.f32.mrf.mxu0
  %v407 = vpop.f32.mrf.mxu0
  %v408 = vadd.f32 %v123, %v407
  %v409 = vpop.f32.mrf.mxu0
  %410 = vmatprep.mubr.bf16.mxu0 0
  %411 = vmatmul.mubr.bf16.gmra.mxu0 %v184
  %v412 = vpop.f32.mrf.mxu0
  %v413 = vadd.f32 %v123, %v412
  %v414 = vpop.f32.mrf.mxu0
  %v415 = vpop.f32.mrf.mxu0
  %v416 = vadd.f32 %v123, %v415
  %v417 = vpop.f32.mrf.mxu0
  %418 = vmatprep.mubr.bf16.mxu0 0
  %419 = vmatmul.mubr.bf16.gmra.mxu0 %v187
  %v420 = vpop.f32.mrf.mxu0
  %v421 = vadd.f32 %v123, %v420
  %v422 = vpop.f32.mrf.mxu0
  %v423 = vpop.f32.mrf.mxu0
  %v424 = vadd.f32 %v123, %v423
  %v425 = vpop.f32.mrf.mxu0
  %426 = vmatprep.mubr.bf16.mxu0 0
  %427 = vmatmul.mubr.bf16.gmra.mxu0 %v190
  %v428 = vpop.f32.mrf.mxu0
  %v429 = vadd.f32 %v123, %v428
  %v430 = vpop.f32.mrf.mxu0
  %v431 = vpop.f32.mrf.mxu0
  %v432 = vadd.f32 %v123, %v431
  %v433 = vpop.f32.mrf.mxu0
  %434 = vmatprep.mubr.bf16.mxu0 0
  %435 = vmatmul.mubr.bf16.gmra.mxu0 %v193
  %v436 = vpop.f32.mrf.mxu0
  %v437 = vadd.f32 %v123, %v436
  %v438 = vpop.f32.mrf.mxu0
  %v439 = vpop.f32.mrf.mxu0
  %v440 = vadd.f32 %v123, %v439
  %v441 = vpop.f32.mrf.mxu0
  %442 = vmatprep.mubr.bf16.mxu0 0
  %443 = vmatmul.mubr.bf16.gmra.mxu0 %v196
  %v444 = vpop.f32.mrf.mxu0
  %v445 = vadd.f32 %v123, %v444
  %v446 = vpop.f32.mrf.mxu0
  %v447 = vpop.f32.mrf.mxu0
  %v448 = vadd.f32 %v123, %v447
  %v449 = vpop.f32.mrf.mxu0
  %450 = vmatprep.mubr.bf16.mxu0 0
  %451 = vmatmul.mubr.bf16.gmra.mxu0 %v199
  %v452 = vpop.f32.mrf.mxu0
  %v453 = vadd.f32 %v123, %v452
  %v454 = vpop.f32.mrf.mxu0
  %v455 = vpop.f32.mrf.mxu0
  %v456 = vadd.f32 %v123, %v455
  %v457 = vpop.f32.mrf.mxu0
  %458 = vmatprep.mubr.bf16.mxu0 0
  %459 = vmatmul.mubr.bf16.gmra.mxu0 %v202
  %v460 = vpop.f32.mrf.mxu0
  %v461 = vadd.f32 %v123, %v460
  %v462 = vpop.f32.mrf.mxu0
  %v463 = vpop.f32.mrf.mxu0
  %v464 = vadd.f32 %v123, %v463
  %v465 = vpop.f32.mrf.mxu0
  %466 = vmatprep.mubr.bf16.mxu0 0
  %467 = vmatmul.mubr.bf16.gmra.mxu0 %v205
  %v468 = vpop.f32.mrf.mxu0
  %v469 = vadd.f32 %v123, %v468
  %v470 = vpop.f32.mrf.mxu0
  %v471 = vpop.f32.mrf.mxu0
  %v472 = vadd.f32 %v123, %v471
  %v473 = vpop.f32.mrf.mxu0
  %474 = vmatprep.mubr.bf16.mxu0 0
  %475 = vmatmul.mubr.bf16.gmra.mxu0 %v208
  %v476 = vpop.f32.mrf.mxu0
  %v477 = vadd.f32 %v123, %v476
  %v478 = vpop.f32.mrf.mxu0
  %v479 = vpop.f32.mrf.mxu0
  %v480 = vadd.f32 %v123, %v479
  %v481 = vpop.f32.mrf.mxu0
  %482 = vmatprep.mubr.bf16.mxu0 0
  %483 = vmatmul.mubr.bf16.gmra.mxu0 %v211
  %v484 = vpop.f32.mrf.mxu0
  %v485 = vadd.f32 %v123, %v484
  %v486 = vpop.f32.mrf.mxu0
  %v487 = vpop.f32.mrf.mxu0
  %v488 = vadd.f32 %v123, %v487
  %v489 = vpop.f32.mrf.mxu0
  %490 = vmatprep.mubr.bf16.mxu0 0
  %491 = vmatmul.mubr.bf16.gmra.mxu0 %v214
  %v492 = vpop.f32.mrf.mxu0
  %v493 = vadd.f32 %v123, %v492
  %v494 = vpop.f32.mrf.mxu0
  %v495 = vpop.f32.mrf.mxu0
  %v496 = vadd.f32 %v123, %v495
  %v497 = vpop.f32.mrf.mxu0
  %498 = vmatprep.mubr.bf16.mxu0 0
  %499 = vmatmul.mubr.bf16.gmra.mxu0 %v217
  %v500 = vpop.f32.mrf.mxu0
  %v501 = vadd.f32 %v123, %v500
  %v502 = vpop.f32.mrf.mxu0
  %v503 = vpop.f32.mrf.mxu0
  %v504 = vadd.f32 %v123, %v503
  %v505 = vpop.f32.mrf.mxu0
  %506 = vmatprep.mubr.bf16.mxu0 0
  %507 = vmatmul.mubr.bf16.gmra.mxu0 %v220
  %v508 = vpop.f32.mrf.mxu0
  %v509 = vadd.f32 %v123, %v508
  %v510 = vpop.f32.mrf.mxu0
  %v511 = vpop.f32.mrf.mxu0
  %v512 = vadd.f32 %v123, %v511
  %v513 = vpop.f32.mrf.mxu0
  %514 = vdwg.mxu0
  %v515 = vmax.f32 %v261, 0.0
  %v516 = vmax.f32 %v264, 0.0
  %v517 = vmax.f32 %v269, 0.0
  %v518 = vmax.f32 %v272, 0.0
  %v519 = vmax.f32 %v277, 0.0
  %v520 = vmax.f32 %v280, 0.0
  %v521 = vmax.f32 %v285, 0.0
  %v522 = vmax.f32 %v288, 0.0
  %v523 = vmax.f32 %v293, 0.0
  %v524 = vmax.f32 %v296, 0.0
  %v525 = vmax.f32 %v301, 0.0
  %v526 = vmax.f32 %v304, 0.0
  %v527 = vmax.f32 %v309, 0.0
  %v528 = vmax.f32 %v312, 0.0
  %v529 = vmax.f32 %v317, 0.0
  %v530 = vmax.f32 %v320, 0.0
  %v531 = vmax.f32 %v325, 0.0
  %v532 = vmax.f32 %v328, 0.0
  %v533 = vmax.f32 %v333, 0.0
  %v534 = vmax.f32 %v336, 0.0
  %v535 = vmax.f32 %v341, 0.0
  %v536 = vmax.f32 %v344, 0.0
  %v537 = vmax.f32 %v349, 0.0
  %v538 = vmax.f32 %v352, 0.0
  %v539 = vmax.f32 %v357, 0.0
  %v540 = vmax.f32 %v360, 0.0
  %v541 = vmax.f32 %v365, 0.0
  %v542 = vmax.f32 %v368, 0.0
  %v543 = vmax.f32 %v373, 0.0
  %v544 = vmax.f32 %v376, 0.0
  %v545 = vmax.f32 %v381, 0.0
  %v546 = vmax.f32 %v384, 0.0
  %v547 = vmax.f32 %v389, 0.0
  %v548 = vmax.f32 %v392, 0.0
  %v549 = vmax.f32 %v397, 0.0
  %v550 = vmax.f32 %v400, 0.0
  %v551 = vmax.f32 %v405, 0.0
  %v552 = vmax.f32 %v408, 0.0
  %v553 = vmax.f32 %v413, 0.0
  %v554 = vmax.f32 %v416, 0.0
  %v555 = vmax.f32 %v421, 0.0
  %v556 = vmax.f32 %v424, 0.0
  %v557 = vmax.f32 %v429, 0.0
  %v558 = vmax.f32 %v432, 0.0
  %v559 = vmax.f32 %v437, 0.0
  %v560 = vmax.f32 %v440, 0.0
  %v561 = vmax.f32 %v445, 0.0
  %v562 = vmax.f32 %v448, 0.0
  %v563 = vmax.f32 %v453, 0.0
  %v564 = vmax.f32 %v456, 0.0
  %v565 = vmax.f32 %v461, 0.0
  %v566 = vmax.f32 %v464, 0.0
  %v567 = vmax.f32 %v469, 0.0
  %v568 = vmax.f32 %v472, 0.0
  %v569 = vmax.f32 %v477, 0.0
  %v570 = vmax.f32 %v480, 0.0
  %v571 = vmax.f32 %v485, 0.0
  %v572 = vmax.f32 %v488, 0.0
  %v573 = vmax.f32 %v493, 0.0
  %v574 = vmax.f32 %v496, 0.0
  %v575 = vmax.f32 %v501, 0.0
  %v576 = vmax.f32 %v504, 0.0
  %v577 = vmax.f32 %v509, 0.0
  %v578 = vmax.f32 %v512, 0.0
  %v579 = vpack.c.bf16 %v516, %v515
  %v580 = vpack.c.bf16 %v518, %v517
  %v581 = vpack.c.bf16 %v520, %v519
  %v582 = vpack.c.bf16 %v522, %v521
  %v583 = vpack.c.bf16 %v524, %v523
  %v584 = vpack.c.bf16 %v526, %v525
  %v585 = vpack.c.bf16 %v528, %v527
  %v586 = vpack.c.bf16 %v530, %v529
  %v587 = vpack.c.bf16 %v532, %v531
  %v588 = vpack.c.bf16 %v534, %v533
  %v589 = vpack.c.bf16 %v536, %v535
  %v590 = vpack.c.bf16 %v538, %v537
  %v591 = vpack.c.bf16 %v540, %v539
  %v592 = vpack.c.bf16 %v542, %v541
  %v593 = vpack.c.bf16 %v544, %v543
  %v594 = vpack.c.bf16 %v546, %v545
  %v595 = vpack.c.bf16 %v548, %v547
  %v596 = vpack.c.bf16 %v550, %v549
  %v597 = vpack.c.bf16 %v552, %v551
  %v598 = vpack.c.bf16 %v554, %v553
  %v599 = vpack.c.bf16 %v556, %v555
  %v600 = vpack.c.bf16 %v558, %v557
  %v601 = vpack.c.bf16 %v560, %v559
  %v602 = vpack.c.bf16 %v562, %v561
  %v603 = vpack.c.bf16 %v564, %v563
  %v604 = vpack.c.bf16 %v566, %v565
  %v605 = vpack.c.bf16 %v568, %v567
  %v606 = vpack.c.bf16 %v570, %v569
  %v607 = vpack.c.bf16 %v572, %v571
  %v608 = vpack.c.bf16 %v574, %v573
  %v609 = vpack.c.bf16 %v576, %v575
  %v610 = vpack.c.bf16 %v578, %v577
  %v611 = vld [vmem:[%s3] sm:$0xf]
  %v612 = vld [vmem:[%s3 + $0x4] sm:$0xf]
  %v613 = vld [vmem:[%s3 + $0x8] sm:$0xf]
  %v614 = vld [vmem:[%s3 + $0xc] sm:$0xf]
  %v615 = vld [vmem:[%s4] sm:$0x1]
  %v617 = vlaneseq
  %v618 = vshrl.u32 %v617, 7
  %v619 = vsub.s32 0, %v618
  %v620 = vrot.slane %v615, %v619
  %v626 = vunpack.c.l.b16 %v611
  %v627 = vunpack.c.l.b16 %v612
  %v628 = vunpack.c.l.b16 %v613
  %v629 = vunpack.c.l.b16 %v614
  %v630 = vpack.c.b16 %v627, %v626
  %v631 = vpack.c.b16 %v629, %v628
  %vm634 = vcmask 261120
  %v636 = vsel %vm634, %v579, 0
  %v639 = vsel %vm634, %v580, 0
  %v642 = vsel %vm634, %v581, 0
  %v645 = vsel %vm634, %v582, 0
  %v648 = vsel %vm634, %v583, 0
  %v651 = vsel %vm634, %v584, 0
  %v654 = vsel %vm634, %v585, 0
  %v657 = vsel %vm634, %v586, 0
  %v660 = vsel %vm634, %v587, 0
  %v663 = vsel %vm634, %v588, 0
  %v666 = vsel %vm634, %v589, 0
  %v669 = vsel %vm634, %v590, 0
  %v672 = vsel %vm634, %v591, 0
  %v675 = vsel %vm634, %v592, 0
  %v678 = vsel %vm634, %v593, 0
  %v681 = vsel %vm634, %v594, 0
  %v684 = vsel %vm634, %v595, 0
  %v687 = vsel %vm634, %v596, 0
  %v690 = vsel %vm634, %v597, 0
  %v693 = vsel %vm634, %v598, 0
  %v696 = vsel %vm634, %v599, 0
  %v699 = vsel %vm634, %v600, 0
  %v702 = vsel %vm634, %v601, 0
  %v705 = vsel %vm634, %v602, 0
  %v708 = vsel %vm634, %v603, 0
  %v711 = vsel %vm634, %v604, 0
  %v714 = vsel %vm634, %v605, 0
  %v717 = vsel %vm634, %v606, 0
  %v720 = vsel %vm634, %v607, 0
  %v723 = vsel %vm634, %v608, 0
  %v726 = vsel %vm634, %v609, 0
  %v729 = vsel %vm634, %v610, 0
  %731 = vmatprep.subr.bf16.mxu0 0
  %732 = vmatpush1.bf16.msra.mxu0 0
  %733 = vmatprep.subr.bf16.mxu0 0
  %734 = vmatpush1.bf16.msra.mxu0 0
  %735 = vmatprep.subr.bf16.mxu0 0
  %736 = vmatpush1.bf16.msra.mxu0 0
  %737 = vmatprep.subr.bf16.mxu0 0
  %738 = vmatpush1.bf16.msra.mxu0 0
  %739 = vmatprep.subr.bf16.mxu0 0
  %740 = vmatpush1.bf16.msra.mxu0 0
  %741 = vmatprep.subr.bf16.mxu0 0
  %742 = vmatpush1.bf16.msra.mxu0 0
  %743 = vmatprep.subr.bf16.mxu0 0
  %744 = vmatpush1.bf16.msra.mxu0 %v631
  %745 = vmatprep.subr.bf16.mxu0 0
  %746 = vmatpush1.bf16.msra.mxu0 %v630
  %747 = vmatprep.subr.bf16.mxu0 0
  %748 = vmatpush2.bf16.msra.mxu0 0
  %749 = vmatprep.subr.bf16.mxu0 0
  %750 = vmatpush2.bf16.msra.mxu0 0
  %751 = vmatprep.subr.bf16.mxu0 0
  %752 = vmatpush2.bf16.msra.mxu0 0
  %753 = vmatprep.subr.bf16.mxu0 0
  %754 = vmatpush2.bf16.msra.mxu0 0
  %755 = vmatprep.subr.bf16.mxu0 0
  %756 = vmatpush2.bf16.msra.mxu0 0
  %757 = vmatprep.subr.bf16.mxu0 0
  %758 = vmatpush2.bf16.msra.mxu0 0
  %759 = vmatprep.subr.bf16.mxu0 0
  %760 = vmatpush2.bf16.msra.mxu0 0
  %761 = vmatprep.subr.bf16.mxu0 0
  %762 = vmatpush2.bf16.msra.mxu0 0
  %763 = vmatprep.mubr.bf16.mxu0 0
  %764 = vmatmul.mubr.bf16.gmra.mxu0 %v636
  %v765 = vpop.f32.mrf.mxu0
  %v766 = vadd.f32 %v620, %v765
  %v767 = vpop.f32.mrf.mxu0
  %v768 = vpop.f32.mrf.mxu0
  %v769 = vadd.f32 %v620, %v768
  %v770 = vpop.f32.mrf.mxu0
  %771 = vmatprep.mubr.bf16.mxu0 0
  %772 = vmatmul.mubr.bf16.gmra.mxu0 %v639
  %v773 = vpop.f32.mrf.mxu0
  %v774 = vadd.f32 %v620, %v773
  %v775 = vpop.f32.mrf.mxu0
  %v776 = vpop.f32.mrf.mxu0
  %v777 = vadd.f32 %v620, %v776
  %v778 = vpop.f32.mrf.mxu0
  %779 = vmatprep.mubr.bf16.mxu0 0
  %780 = vmatmul.mubr.bf16.gmra.mxu0 %v642
  %v781 = vpop.f32.mrf.mxu0
  %v782 = vadd.f32 %v620, %v781
  %v783 = vpop.f32.mrf.mxu0
  %v784 = vpop.f32.mrf.mxu0
  %v785 = vadd.f32 %v620, %v784
  %v786 = vpop.f32.mrf.mxu0
  %787 = vmatprep.mubr.bf16.mxu0 0
  %788 = vmatmul.mubr.bf16.gmra.mxu0 %v645
  %v789 = vpop.f32.mrf.mxu0
  %v790 = vadd.f32 %v620, %v789
  %v791 = vpop.f32.mrf.mxu0
  %v792 = vpop.f32.mrf.mxu0
  %v793 = vadd.f32 %v620, %v792
  %v794 = vpop.f32.mrf.mxu0
  %795 = vmatprep.mubr.bf16.mxu0 0
  %796 = vmatmul.mubr.bf16.gmra.mxu0 %v648
  %v797 = vpop.f32.mrf.mxu0
  %v798 = vadd.f32 %v620, %v797
  %v799 = vpop.f32.mrf.mxu0
  %v800 = vpop.f32.mrf.mxu0
  %v801 = vadd.f32 %v620, %v800
  %v802 = vpop.f32.mrf.mxu0
  %803 = vmatprep.mubr.bf16.mxu0 0
  %804 = vmatmul.mubr.bf16.gmra.mxu0 %v651
  %v805 = vpop.f32.mrf.mxu0
  %v806 = vadd.f32 %v620, %v805
  %v807 = vpop.f32.mrf.mxu0
  %v808 = vpop.f32.mrf.mxu0
  %v809 = vadd.f32 %v620, %v808
  %v810 = vpop.f32.mrf.mxu0
  %811 = vmatprep.mubr.bf16.mxu0 0
  %812 = vmatmul.mubr.bf16.gmra.mxu0 %v654
  %v813 = vpop.f32.mrf.mxu0
  %v814 = vadd.f32 %v620, %v813
  %v815 = vpop.f32.mrf.mxu0
  %v816 = vpop.f32.mrf.mxu0
  %v817 = vadd.f32 %v620, %v816
  %v818 = vpop.f32.mrf.mxu0
  %819 = vmatprep.mubr.bf16.mxu0 0
  %820 = vmatmul.mubr.bf16.gmra.mxu0 %v657
  %v821 = vpop.f32.mrf.mxu0
  %v822 = vadd.f32 %v620, %v821
  %v823 = vpop.f32.mrf.mxu0
  %v824 = vpop.f32.mrf.mxu0
  %v825 = vadd.f32 %v620, %v824
  %v826 = vpop.f32.mrf.mxu0
  %827 = vmatprep.mubr.bf16.mxu0 0
  %828 = vmatmul.mubr.bf16.gmra.mxu0 %v660
  %v829 = vpop.f32.mrf.mxu0
  %v830 = vadd.f32 %v620, %v829
  %v831 = vpop.f32.mrf.mxu0
  %v832 = vpop.f32.mrf.mxu0
  %v833 = vadd.f32 %v620, %v832
  %v834 = vpop.f32.mrf.mxu0
  %835 = vmatprep.mubr.bf16.mxu0 0
  %836 = vmatmul.mubr.bf16.gmra.mxu0 %v663
  %v837 = vpop.f32.mrf.mxu0
  %v838 = vadd.f32 %v620, %v837
  %v839 = vpop.f32.mrf.mxu0
  %v840 = vpop.f32.mrf.mxu0
  %v841 = vadd.f32 %v620, %v840
  %v842 = vpop.f32.mrf.mxu0
  %843 = vmatprep.mubr.bf16.mxu0 0
  %844 = vmatmul.mubr.bf16.gmra.mxu0 %v666
  %v845 = vpop.f32.mrf.mxu0
  %v846 = vadd.f32 %v620, %v845
  %v847 = vpop.f32.mrf.mxu0
  %v848 = vpop.f32.mrf.mxu0
  %v849 = vadd.f32 %v620, %v848
  %v850 = vpop.f32.mrf.mxu0
  %851 = vmatprep.mubr.bf16.mxu0 0
  %852 = vmatmul.mubr.bf16.gmra.mxu0 %v669
  %v853 = vpop.f32.mrf.mxu0
  %v854 = vadd.f32 %v620, %v853
  %v855 = vpop.f32.mrf.mxu0
  %v856 = vpop.f32.mrf.mxu0
  %v857 = vadd.f32 %v620, %v856
  %v858 = vpop.f32.mrf.mxu0
  %859 = vmatprep.mubr.bf16.mxu0 0
  %860 = vmatmul.mubr.bf16.gmra.mxu0 %v672
  %v861 = vpop.f32.mrf.mxu0
  %v862 = vadd.f32 %v620, %v861
  %v863 = vpop.f32.mrf.mxu0
  %v864 = vpop.f32.mrf.mxu0
  %v865 = vadd.f32 %v620, %v864
  %v866 = vpop.f32.mrf.mxu0
  %867 = vmatprep.mubr.bf16.mxu0 0
  %868 = vmatmul.mubr.bf16.gmra.mxu0 %v675
  %v869 = vpop.f32.mrf.mxu0
  %v870 = vadd.f32 %v620, %v869
  %v871 = vpop.f32.mrf.mxu0
  %v872 = vpop.f32.mrf.mxu0
  %v873 = vadd.f32 %v620, %v872
  %v874 = vpop.f32.mrf.mxu0
  %875 = vmatprep.mubr.bf16.mxu0 0
  %876 = vmatmul.mubr.bf16.gmra.mxu0 %v678
  %v877 = vpop.f32.mrf.mxu0
  %v878 = vadd.f32 %v620, %v877
  %v879 = vpop.f32.mrf.mxu0
  %v880 = vpop.f32.mrf.mxu0
  %v881 = vadd.f32 %v620, %v880
  %v882 = vpop.f32.mrf.mxu0
  %883 = vmatprep.mubr.bf16.mxu0 0
  %884 = vmatmul.mubr.bf16.gmra.mxu0 %v681
  %v885 = vpop.f32.mrf.mxu0
  %v886 = vadd.f32 %v620, %v885
  %v887 = vpop.f32.mrf.mxu0
  %v888 = vpop.f32.mrf.mxu0
  %v889 = vadd.f32 %v620, %v888
  %v890 = vpop.f32.mrf.mxu0
  %891 = vmatprep.mubr.bf16.mxu0 0
  %892 = vmatmul.mubr.bf16.gmra.mxu0 %v684
  %v893 = vpop.f32.mrf.mxu0
  %v894 = vadd.f32 %v620, %v893
  %v895 = vpop.f32.mrf.mxu0
  %v896 = vpop.f32.mrf.mxu0
  %v897 = vadd.f32 %v620, %v896
  %v898 = vpop.f32.mrf.mxu0
  %899 = vmatprep.mubr.bf16.mxu0 0
  %900 = vmatmul.mubr.bf16.gmra.mxu0 %v687
  %v901 = vpop.f32.mrf.mxu0
  %v902 = vadd.f32 %v620, %v901
  %v903 = vpop.f32.mrf.mxu0
  %v904 = vpop.f32.mrf.mxu0
  %v905 = vadd.f32 %v620, %v904
  %v906 = vpop.f32.mrf.mxu0
  %907 = vmatprep.mubr.bf16.mxu0 0
  %908 = vmatmul.mubr.bf16.gmra.mxu0 %v690
  %v909 = vpop.f32.mrf.mxu0
  %v910 = vadd.f32 %v620, %v909
  %v911 = vpop.f32.mrf.mxu0
  %v912 = vpop.f32.mrf.mxu0
  %v913 = vadd.f32 %v620, %v912
  %v914 = vpop.f32.mrf.mxu0
  %915 = vmatprep.mubr.bf16.mxu0 0
  %916 = vmatmul.mubr.bf16.gmra.mxu0 %v693
  %v917 = vpop.f32.mrf.mxu0
  %v918 = vadd.f32 %v620, %v917
  %v919 = vpop.f32.mrf.mxu0
  %v920 = vpop.f32.mrf.mxu0
  %v921 = vadd.f32 %v620, %v920
  %v922 = vpop.f32.mrf.mxu0
  %923 = vmatprep.mubr.bf16.mxu0 0
  %924 = vmatmul.mubr.bf16.gmra.mxu0 %v696
  %v925 = vpop.f32.mrf.mxu0
  %v926 = vadd.f32 %v620, %v925
  %v927 = vpop.f32.mrf.mxu0
  %v928 = vpop.f32.mrf.mxu0
  %v929 = vadd.f32 %v620, %v928
  %v930 = vpop.f32.mrf.mxu0
  %931 = vmatprep.mubr.bf16.mxu0 0
  %932 = vmatmul.mubr.bf16.gmra.mxu0 %v699
  %v933 = vpop.f32.mrf.mxu0
  %v934 = vadd.f32 %v620, %v933
  %v935 = vpop.f32.mrf.mxu0
  %v936 = vpop.f32.mrf.mxu0
  %v937 = vadd.f32 %v620, %v936
  %v938 = vpop.f32.mrf.mxu0
  %939 = vmatprep.mubr.bf16.mxu0 0
  %940 = vmatmul.mubr.bf16.gmra.mxu0 %v702
  %v941 = vpop.f32.mrf.mxu0
  %v942 = vadd.f32 %v620, %v941
  %v943 = vpop.f32.mrf.mxu0
  %v944 = vpop.f32.mrf.mxu0
  %v945 = vadd.f32 %v620, %v944
  %v946 = vpop.f32.mrf.mxu0
  %947 = vmatprep.mubr.bf16.mxu0 0
  %948 = vmatmul.mubr.bf16.gmra.mxu0 %v705
  %v949 = vpop.f32.mrf.mxu0
  %v950 = vadd.f32 %v620, %v949
  %v951 = vpop.f32.mrf.mxu0
  %v952 = vpop.f32.mrf.mxu0
  %v953 = vadd.f32 %v620, %v952
  %v954 = vpop.f32.mrf.mxu0
  %955 = vmatprep.mubr.bf16.mxu0 0
  %956 = vmatmul.mubr.bf16.gmra.mxu0 %v708
  %v957 = vpop.f32.mrf.mxu0
  %v958 = vadd.f32 %v620, %v957
  %v959 = vpop.f32.mrf.mxu0
  %v960 = vpop.f32.mrf.mxu0
  %v961 = vadd.f32 %v620, %v960
  %v962 = vpop.f32.mrf.mxu0
  %963 = vmatprep.mubr.bf16.mxu0 0
  %964 = vmatmul.mubr.bf16.gmra.mxu0 %v711
  %v965 = vpop.f32.mrf.mxu0
  %v966 = vadd.f32 %v620, %v965
  %v967 = vpop.f32.mrf.mxu0
  %v968 = vpop.f32.mrf.mxu0
  %v969 = vadd.f32 %v620, %v968
  %v970 = vpop.f32.mrf.mxu0
  %971 = vmatprep.mubr.bf16.mxu0 0
  %972 = vmatmul.mubr.bf16.gmra.mxu0 %v714
  %v973 = vpop.f32.mrf.mxu0
  %v974 = vadd.f32 %v620, %v973
  %v975 = vpop.f32.mrf.mxu0
  %v976 = vpop.f32.mrf.mxu0
  %v977 = vadd.f32 %v620, %v976
  %v978 = vpop.f32.mrf.mxu0
  %979 = vmatprep.mubr.bf16.mxu0 0
  %980 = vmatmul.mubr.bf16.gmra.mxu0 %v717
  %v981 = vpop.f32.mrf.mxu0
  %v982 = vadd.f32 %v620, %v981
  %v983 = vpop.f32.mrf.mxu0
  %v984 = vpop.f32.mrf.mxu0
  %v985 = vadd.f32 %v620, %v984
  %v986 = vpop.f32.mrf.mxu0
  %987 = vmatprep.mubr.bf16.mxu0 0
  %988 = vmatmul.mubr.bf16.gmra.mxu0 %v720
  %v989 = vpop.f32.mrf.mxu0
  %v990 = vadd.f32 %v620, %v989
  %v991 = vpop.f32.mrf.mxu0
  %v992 = vpop.f32.mrf.mxu0
  %v993 = vadd.f32 %v620, %v992
  %v994 = vpop.f32.mrf.mxu0
  %995 = vmatprep.mubr.bf16.mxu0 0
  %996 = vmatmul.mubr.bf16.gmra.mxu0 %v723
  %v997 = vpop.f32.mrf.mxu0
  %v998 = vadd.f32 %v620, %v997
  %v999 = vpop.f32.mrf.mxu0
  %v1000 = vpop.f32.mrf.mxu0
  %v1001 = vadd.f32 %v620, %v1000
  %v1002 = vpop.f32.mrf.mxu0
  %1003 = vmatprep.mubr.bf16.mxu0 0
  %1004 = vmatmul.mubr.bf16.gmra.mxu0 %v726
  %v1005 = vpop.f32.mrf.mxu0
  %v1006 = vadd.f32 %v620, %v1005
  %v1007 = vpop.f32.mrf.mxu0
  %v1008 = vpop.f32.mrf.mxu0
  %v1009 = vadd.f32 %v620, %v1008
  %v1010 = vpop.f32.mrf.mxu0
  %1011 = vmatprep.mubr.bf16.mxu0 0
  %1012 = vmatmul.mubr.bf16.gmra.mxu0 %v729
  %v1013 = vpop.f32.mrf.mxu0
  %v1014 = vadd.f32 %v620, %v1013
  %v1015 = vpop.f32.mrf.mxu0
  %v1016 = vpop.f32.mrf.mxu0
  %v1017 = vadd.f32 %v620, %v1016
  %v1018 = vpop.f32.mrf.mxu0
  %1019 = vdwg.mxu0
  %v1020 = vpack.c.bf16 %v769, %v766
  %v1021 = vpack.c.bf16 %v777, %v774
  %v1022 = vpack.c.bf16 %v785, %v782
  %v1023 = vpack.c.bf16 %v793, %v790
  %v1024 = vpack.c.bf16 %v801, %v798
  %v1025 = vpack.c.bf16 %v809, %v806
  %v1026 = vpack.c.bf16 %v817, %v814
  %v1027 = vpack.c.bf16 %v825, %v822
  %v1028 = vpack.c.bf16 %v833, %v830
  %v1029 = vpack.c.bf16 %v841, %v838
  %v1030 = vpack.c.bf16 %v849, %v846
  %v1031 = vpack.c.bf16 %v857, %v854
  %v1032 = vpack.c.bf16 %v865, %v862
  %v1033 = vpack.c.bf16 %v873, %v870
  %v1034 = vpack.c.bf16 %v881, %v878
  %v1035 = vpack.c.bf16 %v889, %v886
  %v1036 = vpack.c.bf16 %v897, %v894
  %v1037 = vpack.c.bf16 %v905, %v902
  %v1038 = vpack.c.bf16 %v913, %v910
  %v1039 = vpack.c.bf16 %v921, %v918
  %v1040 = vpack.c.bf16 %v929, %v926
  %v1041 = vpack.c.bf16 %v937, %v934
  %v1042 = vpack.c.bf16 %v945, %v942
  %v1043 = vpack.c.bf16 %v953, %v950
  %v1044 = vpack.c.bf16 %v961, %v958
  %v1045 = vpack.c.bf16 %v969, %v966
  %v1046 = vpack.c.bf16 %v977, %v974
  %v1047 = vpack.c.bf16 %v985, %v982
  %v1048 = vpack.c.bf16 %v993, %v990
  %v1049 = vpack.c.bf16 %v1001, %v998
  %v1050 = vpack.c.bf16 %v1009, %v1006
  %v1051 = vpack.c.bf16 %v1017, %v1014
  %v1084 = vunpack.c.l.b16 %v1020
  %v1085 = vunpack.c.h.b16 %v1020
  %v1086 = vunpack.c.l.b16 %v1021
  %v1087 = vunpack.c.h.b16 %v1021
  %v1088 = vunpack.c.l.b16 %v1022
  %v1089 = vunpack.c.h.b16 %v1022
  %v1090 = vunpack.c.l.b16 %v1023
  %v1091 = vunpack.c.h.b16 %v1023
  %v1092 = vunpack.c.l.b16 %v1024
  %v1093 = vunpack.c.h.b16 %v1024
  %v1094 = vunpack.c.l.b16 %v1025
  %v1095 = vunpack.c.h.b16 %v1025
  %v1096 = vunpack.c.l.b16 %v1026
  %v1097 = vunpack.c.h.b16 %v1026
  %v1098 = vunpack.c.l.b16 %v1027
  %v1099 = vunpack.c.h.b16 %v1027
  %v1100 = vunpack.c.l.b16 %v1028
  %v1101 = vunpack.c.h.b16 %v1028
  %v1102 = vunpack.c.l.b16 %v1029
  %v1103 = vunpack.c.h.b16 %v1029
  %v1104 = vunpack.c.l.b16 %v1030
  %v1105 = vunpack.c.h.b16 %v1030
  %v1106 = vunpack.c.l.b16 %v1031
  %v1107 = vunpack.c.h.b16 %v1031
  %v1108 = vunpack.c.l.b16 %v1032
  %v1109 = vunpack.c.h.b16 %v1032
  %v1110 = vunpack.c.l.b16 %v1033
  %v1111 = vunpack.c.h.b16 %v1033
  %v1112 = vunpack.c.l.b16 %v1034
  %v1113 = vunpack.c.h.b16 %v1034
  %v1114 = vunpack.c.l.b16 %v1035
  %v1115 = vunpack.c.h.b16 %v1035
  %v1116 = vunpack.c.l.b16 %v1036
  %v1117 = vunpack.c.h.b16 %v1036
  %v1118 = vunpack.c.l.b16 %v1037
  %v1119 = vunpack.c.h.b16 %v1037
  %v1120 = vunpack.c.l.b16 %v1038
  %v1121 = vunpack.c.h.b16 %v1038
  %v1122 = vunpack.c.l.b16 %v1039
  %v1123 = vunpack.c.h.b16 %v1039
  %v1124 = vunpack.c.l.b16 %v1040
  %v1125 = vunpack.c.h.b16 %v1040
  %v1126 = vunpack.c.l.b16 %v1041
  %v1127 = vunpack.c.h.b16 %v1041
  %v1128 = vunpack.c.l.b16 %v1042
  %v1129 = vunpack.c.h.b16 %v1042
  %v1130 = vunpack.c.l.b16 %v1043
  %v1131 = vunpack.c.h.b16 %v1043
  %v1132 = vunpack.c.l.b16 %v1044
  %v1133 = vunpack.c.h.b16 %v1044
  %v1134 = vunpack.c.l.b16 %v1045
  %v1135 = vunpack.c.h.b16 %v1045
  %v1136 = vunpack.c.l.b16 %v1046
  %v1137 = vunpack.c.h.b16 %v1046
  %v1138 = vunpack.c.l.b16 %v1047
  %v1139 = vunpack.c.h.b16 %v1047
  %v1140 = vunpack.c.l.b16 %v1048
  %v1141 = vunpack.c.h.b16 %v1048
  %v1142 = vunpack.c.l.b16 %v1049
  %v1143 = vunpack.c.h.b16 %v1049
  %v1144 = vunpack.c.l.b16 %v1050
  %v1145 = vunpack.c.h.b16 %v1050
  %v1146 = vunpack.c.l.b16 %v1051
  %v1147 = vunpack.c.h.b16 %v1051
  %v1148 = vpack.c.b16 %v1084, %v1084
  %v1149 = vpack.c.b16 %v1085, %v1085
  %v1150 = vpack.c.b16 %v1086, %v1086
  %v1151 = vpack.c.b16 %v1087, %v1087
  %v1152 = vpack.c.b16 %v1088, %v1088
  %v1153 = vpack.c.b16 %v1089, %v1089
  %v1154 = vpack.c.b16 %v1090, %v1090
  %v1155 = vpack.c.b16 %v1091, %v1091
  %v1156 = vpack.c.b16 %v1092, %v1092
  %v1157 = vpack.c.b16 %v1093, %v1093
  %v1158 = vpack.c.b16 %v1094, %v1094
  %v1159 = vpack.c.b16 %v1095, %v1095
  %v1160 = vpack.c.b16 %v1096, %v1096
  %v1161 = vpack.c.b16 %v1097, %v1097
  %v1162 = vpack.c.b16 %v1098, %v1098
  %v1163 = vpack.c.b16 %v1099, %v1099
  %v1164 = vpack.c.b16 %v1100, %v1100
  %v1165 = vpack.c.b16 %v1101, %v1101
  %v1166 = vpack.c.b16 %v1102, %v1102
  %v1167 = vpack.c.b16 %v1103, %v1103
  %v1168 = vpack.c.b16 %v1104, %v1104
  %v1169 = vpack.c.b16 %v1105, %v1105
  %v1170 = vpack.c.b16 %v1106, %v1106
  %v1171 = vpack.c.b16 %v1107, %v1107
  %v1172 = vpack.c.b16 %v1108, %v1108
  %v1173 = vpack.c.b16 %v1109, %v1109
  %v1174 = vpack.c.b16 %v1110, %v1110
  %v1175 = vpack.c.b16 %v1111, %v1111
  %v1176 = vpack.c.b16 %v1112, %v1112
  %v1177 = vpack.c.b16 %v1113, %v1113
  %v1178 = vpack.c.b16 %v1114, %v1114
  %v1179 = vpack.c.b16 %v1115, %v1115
  %v1180 = vpack.c.b16 %v1116, %v1116
  %v1181 = vpack.c.b16 %v1117, %v1117
  %v1182 = vpack.c.b16 %v1118, %v1118
  %v1183 = vpack.c.b16 %v1119, %v1119
  %v1184 = vpack.c.b16 %v1120, %v1120
  %v1185 = vpack.c.b16 %v1121, %v1121
  %v1186 = vpack.c.b16 %v1122, %v1122
  %v1187 = vpack.c.b16 %v1123, %v1123
  %v1188 = vpack.c.b16 %v1124, %v1124
  %v1189 = vpack.c.b16 %v1125, %v1125
  %v1190 = vpack.c.b16 %v1126, %v1126
  %v1191 = vpack.c.b16 %v1127, %v1127
  %v1192 = vpack.c.b16 %v1128, %v1128
  %v1193 = vpack.c.b16 %v1129, %v1129
  %v1194 = vpack.c.b16 %v1130, %v1130
  %v1195 = vpack.c.b16 %v1131, %v1131
  %v1196 = vpack.c.b16 %v1132, %v1132
  %v1197 = vpack.c.b16 %v1133, %v1133
  %v1198 = vpack.c.b16 %v1134, %v1134
  %v1199 = vpack.c.b16 %v1135, %v1135
  %v1200 = vpack.c.b16 %v1136, %v1136
  %v1201 = vpack.c.b16 %v1137, %v1137
  %v1202 = vpack.c.b16 %v1138, %v1138
  %v1203 = vpack.c.b16 %v1139, %v1139
  %v1204 = vpack.c.b16 %v1140, %v1140
  %v1205 = vpack.c.b16 %v1141, %v1141
  %v1206 = vpack.c.b16 %v1142, %v1142
  %v1207 = vpack.c.b16 %v1143, %v1143
  %v1208 = vpack.c.b16 %v1144, %v1144
  %v1209 = vpack.c.b16 %v1145, %v1145
  %v1210 = vpack.c.b16 %v1146, %v1146
  %v1211 = vpack.c.b16 %v1147, %v1147
  %vm1276 = vcmask 27648
  %1277 = vst.msk [vmem:[%s5] sm:$0xf] %vm1276, %v1148
  %1278 = vst.msk [vmem:[%s5 + $0x4] sm:$0xf] %vm1276, %v1149
  %1279 = vst.msk [vmem:[%s5 + $0x8] sm:$0xf] %vm1276, %v1150
  %1280 = vst.msk [vmem:[%s5 + $0xc] sm:$0xf] %vm1276, %v1151
  %1281 = vst.msk [vmem:[%s5 + $0x10] sm:$0xf] %vm1276, %v1152
  %1282 = vst.msk [vmem:[%s5 + $0x14] sm:$0xf] %vm1276, %v1153
  %1283 = vst.msk [vmem:[%s5 + $0x18] sm:$0xf] %vm1276, %v1154
  %1284 = vst.msk [vmem:[%s5 + $0x1c] sm:$0xf] %vm1276, %v1155
  %1285 = vst.msk [vmem:[%s5 + $0x20] sm:$0xf] %vm1276, %v1156
  %1286 = vst.msk [vmem:[%s5 + $0x24] sm:$0xf] %vm1276, %v1157
  %1287 = vst.msk [vmem:[%s5 + $0x28] sm:$0xf] %vm1276, %v1158
  %1288 = vst.msk [vmem:[%s5 + $0x2c] sm:$0xf] %vm1276, %v1159
  %1289 = vst.msk [vmem:[%s5 + $0x30] sm:$0xf] %vm1276, %v1160
  %1290 = vst.msk [vmem:[%s5 + $0x34] sm:$0xf] %vm1276, %v1161
  %1291 = vst.msk [vmem:[%s5 + $0x38] sm:$0xf] %vm1276, %v1162
  %1292 = vst.msk [vmem:[%s5 + $0x3c] sm:$0xf] %vm1276, %v1163
  %1293 = vst.msk [vmem:[%s5 + $0x40] sm:$0xf] %vm1276, %v1164
  %1294 = vst.msk [vmem:[%s5 + $0x44] sm:$0xf] %vm1276, %v1165
  %1295 = vst.msk [vmem:[%s5 + $0x48] sm:$0xf] %vm1276, %v1166
  %1296 = vst.msk [vmem:[%s5 + $0x4c] sm:$0xf] %vm1276, %v1167
  %1297 = vst.msk [vmem:[%s5 + $0x50] sm:$0xf] %vm1276, %v1168
  %1298 = vst.msk [vmem:[%s5 + $0x54] sm:$0xf] %vm1276, %v1169
  %1299 = vst.msk [vmem:[%s5 + $0x58] sm:$0xf] %vm1276, %v1170
  %1300 = vst.msk [vmem:[%s5 + $0x5c] sm:$0xf] %vm1276, %v1171
  %1301 = vst.msk [vmem:[%s5 + $0x60] sm:$0xf] %vm1276, %v1172
  %1302 = vst.msk [vmem:[%s5 + $0x64] sm:$0xf] %vm1276, %v1173
  %1303 = vst.msk [vmem:[%s5 + $0x68] sm:$0xf] %vm1276, %v1174
  %1304 = vst.msk [vmem:[%s5 + $0x6c] sm:$0xf] %vm1276, %v1175
  %1305 = vst.msk [vmem:[%s5 + $0x70] sm:$0xf] %vm1276, %v1176
  %1306 = vst.msk [vmem:[%s5 + $0x74] sm:$0xf] %vm1276, %v1177
  %1307 = vst.msk [vmem:[%s5 + $0x78] sm:$0xf] %vm1276, %v1178
  %1308 = vst.msk [vmem:[%s5 + $0x7c] sm:$0xf] %vm1276, %v1179
  %1309 = vst.msk [vmem:[%s5 + $0x80] sm:$0xf] %vm1276, %v1180
  %1310 = vst.msk [vmem:[%s5 + $0x84] sm:$0xf] %vm1276, %v1181
  %1311 = vst.msk [vmem:[%s5 + $0x88] sm:$0xf] %vm1276, %v1182
  %1312 = vst.msk [vmem:[%s5 + $0x8c] sm:$0xf] %vm1276, %v1183
  %1313 = vst.msk [vmem:[%s5 + $0x90] sm:$0xf] %vm1276, %v1184
  %1314 = vst.msk [vmem:[%s5 + $0x94] sm:$0xf] %vm1276, %v1185
  %1315 = vst.msk [vmem:[%s5 + $0x98] sm:$0xf] %vm1276, %v1186
  %1316 = vst.msk [vmem:[%s5 + $0x9c] sm:$0xf] %vm1276, %v1187
  %1317 = vst.msk [vmem:[%s5 + $0xa0] sm:$0xf] %vm1276, %v1188
  %1318 = vst.msk [vmem:[%s5 + $0xa4] sm:$0xf] %vm1276, %v1189
  %1319 = vst.msk [vmem:[%s5 + $0xa8] sm:$0xf] %vm1276, %v1190
  %1320 = vst.msk [vmem:[%s5 + $0xac] sm:$0xf] %vm1276, %v1191
  %1321 = vst.msk [vmem:[%s5 + $0xb0] sm:$0xf] %vm1276, %v1192
  %1322 = vst.msk [vmem:[%s5 + $0xb4] sm:$0xf] %vm1276, %v1193
  %1323 = vst.msk [vmem:[%s5 + $0xb8] sm:$0xf] %vm1276, %v1194
  %1324 = vst.msk [vmem:[%s5 + $0xbc] sm:$0xf] %vm1276, %v1195
  %1325 = vst.msk [vmem:[%s5 + $0xc0] sm:$0xf] %vm1276, %v1196
  %1326 = vst.msk [vmem:[%s5 + $0xc4] sm:$0xf] %vm1276, %v1197
  %1327 = vst.msk [vmem:[%s5 + $0xc8] sm:$0xf] %vm1276, %v1198
  %1328 = vst.msk [vmem:[%s5 + $0xcc] sm:$0xf] %vm1276, %v1199
  %1329 = vst.msk [vmem:[%s5 + $0xd0] sm:$0xf] %vm1276, %v1200
  %1330 = vst.msk [vmem:[%s5 + $0xd4] sm:$0xf] %vm1276, %v1201
  %1331 = vst.msk [vmem:[%s5 + $0xd8] sm:$0xf] %vm1276, %v1202
  %1332 = vst.msk [vmem:[%s5 + $0xdc] sm:$0xf] %vm1276, %v1203
  %1333 = vst.msk [vmem:[%s5 + $0xe0] sm:$0xf] %vm1276, %v1204
  %1334 = vst.msk [vmem:[%s5 + $0xe4] sm:$0xf] %vm1276, %v1205
  %1335 = vst.msk [vmem:[%s5 + $0xe8] sm:$0xf] %vm1276, %v1206
  %1336 = vst.msk [vmem:[%s5 + $0xec] sm:$0xf] %vm1276, %v1207
  %1337 = vst.msk [vmem:[%s5 + $0xf0] sm:$0xf] %vm1276, %v1208
  %1338 = vst.msk [vmem:[%s5 + $0xf4] sm:$0xf] %vm1276, %v1209
  %1339 = vst.msk [vmem:[%s5 + $0xf8] sm:$0xf] %vm1276, %v1210
  %1340 = vst.msk [vmem:[%s5 + $0xfc] sm:$0xf] %vm1276, %v1211
  // Predicated region
  $region22: #{tpu_custom_call.1} parent=0 // pred_check
    _
  $region23: #{tpu_custom_call.1} parent=0 // pred_check_branch
    %1342 = sbr.rel (0) target = $region25
  $region24: #{tpu_custom_call.1} parent=0 // pred_region
    _
  $region25: #{tpu_custom_call.1} parent=0 // pred_fallthru
    _
  // Predicated region
  $region26: #{tpu_custom_call.1} parent=0 // pred_check
    _
  $region27: #{tpu_custom_call.1} parent=0 // pred_check_branch
    %1344 = sbr.rel (0) target = $region29
  $region28: #{tpu_custom_call.1} parent=0 // pred_region
    _
  $region29: #{tpu_custom_call.1} parent=0 // pred_fallthru
    _

</llo_original>
